<compile_context>
chip_gen: v5e
topology: v5e:2x2
jax: 0.10.0
libtpu: 0.0.40
codegen_flags: <defaults>
</compile_context>

<pallas_src>
import jax
import jax.numpy as jnp
import numpy as np
from jax.experimental import pallas as pl
from jax.experimental.pallas import tpu as pltpu


def _round_up(a, m):
    return (a + m - 1) // m * m


def _to_kernel_layout(w_pt, H):
    """PyTorch (4H, D) with gate rows [i,f,g,o] -> (D, 4H) with gate cols [i|f|o|g]."""
    w = w_pt.reshape(4, H, -1)
    w = w[jnp.array([0, 1, 3, 2])]                 # i, f, o, g
    return jnp.transpose(w, (2, 0, 1)).reshape(w_pt.shape[1], 4 * H)


# ----------------------------------------------------------------------------
# Weight packing: everything the kernel needs as ONE lane-padded f32 blob.
#   rows [0, D_in)          lanes [0, 4*H0)      : W_ih layer0 (hoisted x projection)
#   rows [r_comb, +sum(H))  lanes [0, 4*sum(H))  : block bi-diagonal combined weight
#                                                  [W_hh_l on diag | W_ih_{l+1} right]
#   rows [r_fcw, +H_last)   lanes [0, NOUT_PAD)  : fc weight^T, zero-padded lanes
#   rows [r_fcb, +1)        lanes [0, NOUT_PAD)  : fc bias, zero-padded lanes
# ----------------------------------------------------------------------------
def pack_stack_regressive(params, *, input_size):
    layers = params['layers']
    H = [l['hidden'] for l in layers]
    L = len(H)
    Hsum = sum(H)
    nout = params['fc_w'].shape[0]
    NOUT_PAD = _round_up(max(nout, 128), 128)
    lane_w = max(4 * H[0], 4 * Hsum, NOUT_PAD)

    r_ih1 = 0
    r_comb = _round_up(input_size, 8)
    r_fcw = _round_up(r_comb + Hsum, 8)
    r_fcb = _round_up(r_fcw + H[-1], 8)
    rows = _round_up(r_fcb + 1, 8)

    blob = jnp.zeros((rows, lane_w), jnp.float32)
    blob = blob.at[r_ih1:r_ih1 + input_size, 0:4 * H[0]].set(
        _to_kernel_layout(layers[0]['w_ih_pt'], H[0]))

    row_off = [0]
    col_off = [0]
    for h in H:
        row_off.append(row_off[-1] + h)
        col_off.append(col_off[-1] + 4 * h)
    for l in range(L):
        # diagonal block: own recurrence
        blob = blob.at[r_comb + row_off[l]:r_comb + row_off[l] + H[l],
                       col_off[l]:col_off[l] + 4 * H[l]].set(
            _to_kernel_layout(layers[l]['w_hh_pt'], H[l]))
        # super-diagonal block: next layer's input projection (input dim == H[l])
        if l + 1 < L:
            blob = blob.at[r_comb + row_off[l]:r_comb + row_off[l] + H[l],
                           col_off[l + 1]:col_off[l + 1] + 4 * H[l + 1]].set(
                _to_kernel_layout(layers[l + 1]['w_ih_pt'], H[l + 1]))

    blob = blob.at[r_fcw:r_fcw + H[-1], 0:nout].set(params['fc_w'].T)
    blob = blob.at[r_fcb:r_fcb + 1, 0:nout].set(params['fc_b'].reshape(1, -1))

    meta = dict(H=tuple(H), D_in=input_size, nout=nout, NOUT_PAD=NOUT_PAD,
                Hsum=Hsum, r_ih1=r_ih1, r_comb=r_comb, r_fcw=r_fcw, r_fcb=r_fcb,
                col_off=tuple(col_off))
    return blob, meta


# ----------------------------------------------------------------------------
# Fused wavefront kernel (built per static shape via closure).
# ----------------------------------------------------------------------------
def _build_fused_kernel(S, Bp, meta, bsel):
    H = meta['H']
    L = len(H)
    Hsum = meta['Hsum']
    D_in = meta['D_in']
    NOUT_PAD = meta['NOUT_PAD']
    r_ih1, r_comb, r_fcw, r_fcb = meta['r_ih1'], meta['r_comb'], meta['r_fcw'], meta['r_fcb']
    col_off = meta['col_off']
    S_pad = _round_up(S, 8)

    def cell(gates, c_prev, Hl):
        # gate columns are [i | f | o | g]: one sigmoid slab + one tanh slab
        sig = jax.nn.sigmoid(gates[:, :3 * Hl])
        g = jnp.tanh(gates[:, 3 * Hl:4 * Hl])
        i = sig[:, 0:Hl]
        f = sig[:, Hl:2 * Hl]
        o = sig[:, 2 * Hl:3 * Hl]
        c = f * c_prev + i * g
        h = o * jnp.tanh(c)
        return h, c

    def kernel(x_ref, w_ref, out_ref, hist_ref):
        if S_pad > S:
            hist_ref[...] = jnp.zeros_like(hist_ref)

        # Static one-time slices of the packed weight blob.
        w_ih1 = w_ref[r_ih1:r_ih1 + D_in, 0:4 * H[0]]          # (D_in, 4H0)
        w_comb = w_ref[r_comb:r_comb + Hsum, 0:4 * Hsum]        # (Hsum, 4*Hsum)
        fc_w = w_ref[r_fcw:r_fcw + H[-1], 0:NOUT_PAD]           # (H_last, NOUT_PAD)
        fc_b = w_ref[r_fcb:r_fcb + 1, 0:NOUT_PAD]               # (1, NOUT_PAD)

        # Hoisted layer-0 input projection for ALL timesteps: one matmul.
        xg0 = jnp.dot(x_ref[...], w_ih1,
                      preferred_element_type=jnp.float32)       # (S*Bp, 4H0)

        h = [jnp.zeros((Bp, Hl), jnp.float32) for Hl in H]
        c = [jnp.zeros((Bp, Hl), jnp.float32) for Hl in H]

        # Layer 0, step 0: h/c start at zero so gates == xg0[0].
        h[0], c[0] = cell(xg0[0:Bp, :], c[0], H[0])
        if L == 1:
            hist_ref[0:1, :] = h[0][bsel:bsel + 1, :]

        # Wavefront: at stage k, layer l (0-based) advances to timestep t = k - l + 1.
        # ONE fused (Bp, Hsum) x (Hsum, 4*Hsum) matmul per stage supplies every layer's
        # recurrent contribution AND every layer>0 input projection.
        n_stages = S + L - 2
        for k in range(n_stages):
            z = jnp.dot(jnp.concatenate(h, axis=1), w_comb,
                        preferred_element_type=jnp.float32)     # (Bp, 4*Hsum)
            for l in range(L):
                t = k - l + 1
                if t < 0 or t >= S:
                    continue
                gates = z[:, col_off[l]:col_off[l] + 4 * H[l]]
                if l == 0:
                    gates = gates + xg0[t * Bp:(t + 1) * Bp, :]
                h[l], c[l] = cell(gates, c[l], H[l])
                if l == L - 1:
                    # literal out[:, -1, :]: last *batch* row at every timestep
                    hist_ref[t:t + 1, :] = h[l][bsel:bsel + 1, :]

        # FC epilogue on the staged history; single lane-dense store.
        out_ref[...] = (jnp.dot(hist_ref[...], fc_w,
                                preferred_element_type=jnp.float32)
                        + fc_b).astype(out_ref.dtype)

    return kernel, S_pad


def stack_regressive_forward(x, blob, meta):
    """x: (S, B, D_in) -> (S, noutputs). Single fused pallas_call, no grid."""
    S, B, D_in = x.shape
    assert D_in == meta['D_in']
    Bp = _round_up(max(B, 8), 8)
    if Bp != B:
        # zero-padded batch rows stay exactly zero through a bias-free LSTM
        x = jnp.pad(x, ((0, 0), (0, Bp - B), (0, 0)))
    x_flat = x.reshape(S * Bp, D_in)            # free metadata reshape in HBM

    kernel, S_pad = _build_fused_kernel(S, Bp, meta, bsel=B - 1)

    vmem = pl.BlockSpec(memory_space=pltpu.MemorySpace.VMEM)
    out = pl.pallas_call(
        kernel,
        out_shape=jax.ShapeDtypeStruct((S_pad, meta['NOUT_PAD']), jnp.float32),
        in_specs=[vmem, vmem],
        out_specs=vmem,
        scratch_shapes=[pltpu.VMEM((S_pad, meta['H'][-1]), jnp.float32)],
    )(x_flat, blob)

    n_batch = S                                  # literal reproduction of x.size(0)
    return out[:S, :meta['nout']].reshape(n_batch, -1)


# ----------------------------------------------------------------------------
# Parameter construction (PyTorch-style uniform init; PyTorch (4H, D) layout kept
# for the pure-JAX reference).
# ----------------------------------------------------------------------------
def make_stack_regressive_params(key, *, input_size, hidden, num_layers, noutputs):
    layers = []

    def add_lstm_stack(key, d_in, Hl, n_layers):
        bound = 1.0 / np.sqrt(Hl)
        for _ in range(n_layers):
            key, k1, k2 = jax.random.split(key, 3)
            w_ih = jax.random.uniform(k1, (4 * Hl, d_in),
                                      minval=-bound, maxval=bound, dtype=jnp.float32)
            w_hh = jax.random.uniform(k2, (4 * Hl, Hl),
                                      minval=-bound, maxval=bound, dtype=jnp.float32)
            layers.append(dict(hidden=Hl, w_ih_pt=w_ih, w_hh_pt=w_hh))
            d_in = Hl
        return key

    key = add_lstm_stack(key, input_size, hidden[0], num_layers)   # lstm1
    key = add_lstm_stack(key, hidden[0], hidden[1], num_layers)    # lstm2

    key, kf1, kf2 = jax.random.split(key, 3)
    bound = 1.0 / np.sqrt(hidden[1])
    fc_w = jax.random.uniform(kf1, (noutputs, hidden[1]),
                              minval=-bound, maxval=bound, dtype=jnp.float32)
    fc_b = jax.random.uniform(kf2, (noutputs,),
                              minval=-bound, maxval=bound, dtype=jnp.float32)
    return dict(layers=layers, fc_w=fc_w, fc_b=fc_b)


# ----------------------------------------------------------------------------
# Pure-JAX reference (PyTorch-layout weights + lax.scan) for correctness.
# ----------------------------------------------------------------------------
def _ref_lstm_layer(x, w_ih_pt, w_hh_pt, H):
    B = x.shape[1]
    wi = w_ih_pt.reshape(4, H, -1)     # gate order i, f, g, o
    wh = w_hh_pt.reshape(4, H, H)

    def step(carry, x_t):
        h, c = carry
        i = jax.nn.sigmoid(x_t @ wi[0].T + h @ wh[0].T)
        f = jax.nn.sigmoid(x_t @ wi[1].T + h @ wh[1].T)
        g = jnp.tanh(x_t @ wi[2].T + h @ wh[2].T)
        o = jax.nn.sigmoid(x_t @ wi[3].T + h @ wh[3].T)
        c = f * c + i * g
        h = o * jnp.tanh(c)
        return (h, c), h

    init = (jnp.zeros((B, H), jnp.float32), jnp.zeros((B, H), jnp.float32))
    _, ys = jax.lax.scan(step, init, x)
    return ys


def _ref_forward(x, params):
    out = x
    for l in params['layers']:
        out = _ref_lstm_layer(out, l['w_ih_pt'], l['w_hh_pt'], l['hidden'])
    last = out[:, -1, :]
    y = last @ params['fc_w'].T + params['fc_b']
    return y.reshape(x.shape[0], -1)


if __name__ == "__main__":
    # Module config (small, consistent with the forward pass)
    noutputs = 8
    num_layers = 1
    input_size = 32
    hidden = [32, 16]
    seq, batch = 8, 4           # x: (seq, batch, input_size) since batch_first=False

    key = jax.random.PRNGKey(0)
    key, kx = jax.random.split(key)
    x = jax.random.normal(kx, (seq, batch, input_size), dtype=jnp.float32)

    params = make_stack_regressive_params(
        key, input_size=input_size, hidden=hidden,
        num_layers=num_layers, noutputs=noutputs)
    blob, meta = pack_stack_regressive(params, input_size=input_size)

    out = stack_regressive_forward(x, blob, meta)
    out = jax.block_until_ready(out)

    ref = jax.block_until_ready(_ref_forward(x, params))
    assert out.shape == (seq, noutputs), out.shape
    np.testing.assert_allclose(np.asarray(out), np.asarray(ref),
                               rtol=5e-3, atol=5e-3)

    print("KERNEL_OK")
</pallas_src>

<mosaic_0001>
module attributes {stable_mosaic.version = 11 : i64} {
  func.func @kernel(%arg0: memref<64x32xf32, #tpu.memory_space<vmem>>, %arg1: memref<104x192xf32, #tpu.memory_space<vmem>>, %arg2: memref<8x128xf32, #tpu.memory_space<vmem>>, %arg3: memref<8x16xf32, #tpu.memory_space<vmem>>) attributes {dimension_semantics = [], scalar_prefetch = 0 : i64, scratch_operands = 1 : i64, tpu.core_type = #tpu.core_type<tc>} {
    %c0 = arith.constant 0 : index
    %c0_0 = arith.constant 0 : index
    %0 = vector.load %arg1[%c0, %c0_0] : memref<104x192xf32, #tpu.memory_space<vmem>>, vector<32x128xf32>
    %c32 = arith.constant 32 : index
    %c0_1 = arith.constant 0 : index
    %1 = vector.load %arg1[%c32, %c0_1] : memref<104x192xf32, #tpu.memory_space<vmem>>, vector<48x192xf32>
    %c80 = arith.constant 80 : index
    %c0_2 = arith.constant 0 : index
    %2 = vector.load %arg1[%c80, %c0_2] : memref<104x192xf32, #tpu.memory_space<vmem>>, vector<16x128xf32>
    %c96 = arith.constant 96 : index
    %c0_3 = arith.constant 0 : index
    %3 = vector.load %arg1[%c96, %c0_3] : memref<104x192xf32, #tpu.memory_space<vmem>>, vector<1x128xf32>
    %c0_4 = arith.constant 0 : index
    %c0_5 = arith.constant 0 : index
    %4 = vector.load %arg0[%c0_4, %c0_5] : memref<64x32xf32, #tpu.memory_space<vmem>>, vector<64x32xf32>
    %cst = arith.constant dense<0.000000e+00> : vector<64x128xf32>
    %5 = tpu.matmul %4, %0, %cst {dimension_numbers = #tpu.dot_dimension_numbers<[1], [0], [0], [1], [0, 0, 1, 1], [], []>} : vector<64x32xf32>, vector<32x128xf32>, vector<64x128xf32> -> vector<64x128xf32>
    %cst_6 = arith.constant 0.000000e+00 : f32
    %6 = vector.broadcast %cst_6 : f32 to vector<8x16xf32>
    %cst_7 = arith.constant 0.000000e+00 : f32
    %7 = vector.broadcast %cst_7 : f32 to vector<8x32xf32>
    %cst_8 = arith.constant 0.000000e+00 : f32
    %8 = vector.broadcast %cst_8 : f32 to vector<8x16xf32>
    %9 = vector.extract_strided_slice %5 {offsets = [0, 0], sizes = [8, 128], strides = [1, 1]} : vector<64x128xf32> to vector<8x128xf32>
    %10 = vector.extract_strided_slice %9 {offsets = [0, 0], sizes = [8, 96], strides = [1, 1]} : vector<8x128xf32> to vector<8x96xf32>
    %11 = arith.negf %10 : vector<8x96xf32>
    %12 = math.exp %11 : vector<8x96xf32>
    %cst_9 = arith.constant 1.000000e+00 : f32
    %13 = vector.broadcast %cst_9 : f32 to vector<8x96xf32>
    %14 = arith.addf %13, %12 : vector<8x96xf32>
    %15 = arith.divf %13, %14 : vector<8x96xf32>
    %16 = vector.extract_strided_slice %9 {offsets = [0, 96], sizes = [8, 32], strides = [1, 1]} : vector<8x128xf32> to vector<8x32xf32>
    %17 = math.tanh %16 : vector<8x32xf32>
    %18 = vector.extract_strided_slice %15 {offsets = [0, 0], sizes = [8, 32], strides = [1, 1]} : vector<8x96xf32> to vector<8x32xf32>
    %19 = vector.extract_strided_slice %15 {offsets = [0, 32], sizes = [8, 32], strides = [1, 1]} : vector<8x96xf32> to vector<8x32xf32>
    %20 = vector.extract_strided_slice %15 {offsets = [0, 64], sizes = [8, 32], strides = [1, 1]} : vector<8x96xf32> to vector<8x32xf32>
    %21 = arith.mulf %19, %7 : vector<8x32xf32>
    %22 = arith.mulf %18, %17 : vector<8x32xf32>
    %23 = arith.addf %21, %22 : vector<8x32xf32>
    %24 = math.tanh %23 : vector<8x32xf32>
    %25 = arith.mulf %20, %24 : vector<8x32xf32>
    %26 = tpu.concatenate %25, %6 in 1 : vector<8x32xf32>, vector<8x16xf32> -> vector<8x48xf32>
    %cst_10 = arith.constant dense<0.000000e+00> : vector<8x192xf32>
    %27 = tpu.matmul %26, %1, %cst_10 {dimension_numbers = #tpu.dot_dimension_numbers<[1], [0], [0], [1], [0, 0, 1, 1], [], []>} : vector<8x48xf32>, vector<48x192xf32>, vector<8x192xf32> -> vector<8x192xf32>
    %28 = vector.extract_strided_slice %27 {offsets = [0, 0], sizes = [8, 128], strides = [1, 1]} : vector<8x192xf32> to vector<8x128xf32>
    %29 = vector.extract_strided_slice %5 {offsets = [8, 0], sizes = [8, 128], strides = [1, 1]} : vector<64x128xf32> to vector<8x128xf32>
    %30 = arith.addf %28, %29 : vector<8x128xf32>
    %31 = vector.extract_strided_slice %30 {offsets = [0, 0], sizes = [8, 96], strides = [1, 1]} : vector<8x128xf32> to vector<8x96xf32>
    %32 = arith.negf %31 : vector<8x96xf32>
    %33 = math.exp %32 : vector<8x96xf32>
    %cst_11 = arith.constant 1.000000e+00 : f32
    %34 = vector.broadcast %cst_11 : f32 to vector<8x96xf32>
    %35 = arith.addf %34, %33 : vector<8x96xf32>
    %36 = arith.divf %34, %35 : vector<8x96xf32>
    %37 = vector.extract_strided_slice %30 {offsets = [0, 96], sizes = [8, 32], strides = [1, 1]} : vector<8x128xf32> to vector<8x32xf32>
    %38 = math.tanh %37 : vector<8x32xf32>
    %39 = vector.extract_strided_slice %36 {offsets = [0, 0], sizes = [8, 32], strides = [1, 1]} : vector<8x96xf32> to vector<8x32xf32>
    %40 = vector.extract_strided_slice %36 {offsets = [0, 32], sizes = [8, 32], strides = [1, 1]} : vector<8x96xf32> to vector<8x32xf32>
    %41 = vector.extract_strided_slice %36 {offsets = [0, 64], sizes = [8, 32], strides = [1, 1]} : vector<8x96xf32> to vector<8x32xf32>
    %42 = arith.mulf %40, %23 : vector<8x32xf32>
    %43 = arith.mulf %39, %38 : vector<8x32xf32>
    %44 = arith.addf %42, %43 : vector<8x32xf32>
    %45 = math.tanh %44 : vector<8x32xf32>
    %46 = arith.mulf %41, %45 : vector<8x32xf32>
    %47 = vector.extract_strided_slice %27 {offsets = [0, 128], sizes = [8, 64], strides = [1, 1]} : vector<8x192xf32> to vector<8x64xf32>
    %48 = vector.extract_strided_slice %47 {offsets = [0, 0], sizes = [8, 48], strides = [1, 1]} : vector<8x64xf32> to vector<8x48xf32>
    %49 = arith.negf %48 : vector<8x48xf32>
    %50 = math.exp %49 : vector<8x48xf32>
    %cst_12 = arith.constant 1.000000e+00 : f32
    %51 = vector.broadcast %cst_12 : f32 to vector<8x48xf32>
    %52 = arith.addf %51, %50 : vector<8x48xf32>
    %53 = arith.divf %51, %52 : vector<8x48xf32>
    %54 = vector.extract_strided_slice %47 {offsets = [0, 48], sizes = [8, 16], strides = [1, 1]} : vector<8x64xf32> to vector<8x16xf32>
    %55 = math.tanh %54 : vector<8x16xf32>
    %56 = vector.extract_strided_slice %53 {offsets = [0, 0], sizes = [8, 16], strides = [1, 1]} : vector<8x48xf32> to vector<8x16xf32>
    %57 = vector.extract_strided_slice %53 {offsets = [0, 16], sizes = [8, 16], strides = [1, 1]} : vector<8x48xf32> to vector<8x16xf32>
    %58 = vector.extract_strided_slice %53 {offsets = [0, 32], sizes = [8, 16], strides = [1, 1]} : vector<8x48xf32> to vector<8x16xf32>
    %59 = arith.mulf %57, %8 : vector<8x16xf32>
    %60 = arith.mulf %56, %55 : vector<8x16xf32>
    %61 = arith.addf %59, %60 : vector<8x16xf32>
    %62 = math.tanh %61 : vector<8x16xf32>
    %63 = arith.mulf %58, %62 : vector<8x16xf32>
    %64 = vector.extract_strided_slice %63 {offsets = [3, 0], sizes = [1, 16], strides = [1, 1]} : vector<8x16xf32> to vector<1x16xf32>
    %c0_13 = arith.constant 0 : index
    %c0_14 = arith.constant 0 : index
    %65 = vector.load %arg3[%c0_13, %c0_14] : memref<8x16xf32, #tpu.memory_space<vmem>>, vector<1x16xf32>
    tpu.vector_store %arg3[%c0_13, %c0_14], %64 {strides = array<i32>} : memref<8x16xf32, #tpu.memory_space<vmem>>, vector<1x16xf32>,
    %66 = tpu.concatenate %46, %63 in 1 : vector<8x32xf32>, vector<8x16xf32> -> vector<8x48xf32>
    %cst_15 = arith.constant dense<0.000000e+00> : vector<8x192xf32>
    %67 = tpu.matmul %66, %1, %cst_15 {dimension_numbers = #tpu.dot_dimension_numbers<[1], [0], [0], [1], [0, 0, 1, 1], [], []>} : vector<8x48xf32>, vector<48x192xf32>, vector<8x192xf32> -> vector<8x192xf32>
    %68 = vector.extract_strided_slice %67 {offsets = [0, 0], sizes = [8, 128], strides = [1, 1]} : vector<8x192xf32> to vector<8x128xf32>
    %69 = vector.extract_strided_slice %5 {offsets = [16, 0], sizes = [8, 128], strides = [1, 1]} : vector<64x128xf32> to vector<8x128xf32>
    %70 = arith.addf %68, %69 : vector<8x128xf32>
    %71 = vector.extract_strided_slice %70 {offsets = [0, 0], sizes = [8, 96], strides = [1, 1]} : vector<8x128xf32> to vector<8x96xf32>
    %72 = arith.negf %71 : vector<8x96xf32>
    %73 = math.exp %72 : vector<8x96xf32>
    %cst_16 = arith.constant 1.000000e+00 : f32
    %74 = vector.broadcast %cst_16 : f32 to vector<8x96xf32>
    %75 = arith.addf %74, %73 : vector<8x96xf32>
    %76 = arith.divf %74, %75 : vector<8x96xf32>
    %77 = vector.extract_strided_slice %70 {offsets = [0, 96], sizes = [8, 32], strides = [1, 1]} : vector<8x128xf32> to vector<8x32xf32>
    %78 = math.tanh %77 : vector<8x32xf32>
    %79 = vector.extract_strided_slice %76 {offsets = [0, 0], sizes = [8, 32], strides = [1, 1]} : vector<8x96xf32> to vector<8x32xf32>
    %80 = vector.extract_strided_slice %76 {offsets = [0, 32], sizes = [8, 32], strides = [1, 1]} : vector<8x96xf32> to vector<8x32xf32>
    %81 = vector.extract_strided_slice %76 {offsets = [0, 64], sizes = [8, 32], strides = [1, 1]} : vector<8x96xf32> to vector<8x32xf32>
    %82 = arith.mulf %80, %44 : vector<8x32xf32>
    %83 = arith.mulf %79, %78 : vector<8x32xf32>
    %84 = arith.addf %82, %83 : vector<8x32xf32>
    %85 = math.tanh %84 : vector<8x32xf32>
    %86 = arith.mulf %81, %85 : vector<8x32xf32>
    %87 = vector.extract_strided_slice %67 {offsets = [0, 128], sizes = [8, 64], strides = [1, 1]} : vector<8x192xf32> to vector<8x64xf32>
    %88 = vector.extract_strided_slice %87 {offsets = [0, 0], sizes = [8, 48], strides = [1, 1]} : vector<8x64xf32> to vector<8x48xf32>
    %89 = arith.negf %88 : vector<8x48xf32>
    %90 = math.exp %89 : vector<8x48xf32>
    %cst_17 = arith.constant 1.000000e+00 : f32
    %91 = vector.broadcast %cst_17 : f32 to vector<8x48xf32>
    %92 = arith.addf %91, %90 : vector<8x48xf32>
    %93 = arith.divf %91, %92 : vector<8x48xf32>
    %94 = vector.extract_strided_slice %87 {offsets = [0, 48], sizes = [8, 16], strides = [1, 1]} : vector<8x64xf32> to vector<8x16xf32>
    %95 = math.tanh %94 : vector<8x16xf32>
    %96 = vector.extract_strided_slice %93 {offsets = [0, 0], sizes = [8, 16], strides = [1, 1]} : vector<8x48xf32> to vector<8x16xf32>
    %97 = vector.extract_strided_slice %93 {offsets = [0, 16], sizes = [8, 16], strides = [1, 1]} : vector<8x48xf32> to vector<8x16xf32>
    %98 = vector.extract_strided_slice %93 {offsets = [0, 32], sizes = [8, 16], strides = [1, 1]} : vector<8x48xf32> to vector<8x16xf32>
    %99 = arith.mulf %97, %61 : vector<8x16xf32>
    %100 = arith.mulf %96, %95 : vector<8x16xf32>
    %101 = arith.addf %99, %100 : vector<8x16xf32>
    %102 = math.tanh %101 : vector<8x16xf32>
    %103 = arith.mulf %98, %102 : vector<8x16xf32>
    %104 = vector.extract_strided_slice %103 {offsets = [3, 0], sizes = [1, 16], strides = [1, 1]} : vector<8x16xf32> to vector<1x16xf32>
    %c1 = arith.constant 1 : index
    %c0_18 = arith.constant 0 : index
    %105 = vector.load %arg3[%c1, %c0_18] : memref<8x16xf32, #tpu.memory_space<vmem>>, vector<1x16xf32>
    tpu.vector_store %arg3[%c1, %c0_18], %104 {strides = array<i32>} : memref<8x16xf32, #tpu.memory_space<vmem>>, vector<1x16xf32>,
    %106 = tpu.concatenate %86, %103 in 1 : vector<8x32xf32>, vector<8x16xf32> -> vector<8x48xf32>
    %cst_19 = arith.constant dense<0.000000e+00> : vector<8x192xf32>
    %107 = tpu.matmul %106, %1, %cst_19 {dimension_numbers = #tpu.dot_dimension_numbers<[1], [0], [0], [1], [0, 0, 1, 1], [], []>} : vector<8x48xf32>, vector<48x192xf32>, vector<8x192xf32> -> vector<8x192xf32>
    %108 = vector.extract_strided_slice %107 {offsets = [0, 0], sizes = [8, 128], strides = [1, 1]} : vector<8x192xf32> to vector<8x128xf32>
    %109 = vector.extract_strided_slice %5 {offsets = [24, 0], sizes = [8, 128], strides = [1, 1]} : vector<64x128xf32> to vector<8x128xf32>
    %110 = arith.addf %108, %109 : vector<8x128xf32>
    %111 = vector.extract_strided_slice %110 {offsets = [0, 0], sizes = [8, 96], strides = [1, 1]} : vector<8x128xf32> to vector<8x96xf32>
    %112 = arith.negf %111 : vector<8x96xf32>
    %113 = math.exp %112 : vector<8x96xf32>
    %cst_20 = arith.constant 1.000000e+00 : f32
    %114 = vector.broadcast %cst_20 : f32 to vector<8x96xf32>
    %115 = arith.addf %114, %113 : vector<8x96xf32>
    %116 = arith.divf %114, %115 : vector<8x96xf32>
    %117 = vector.extract_strided_slice %110 {offsets = [0, 96], sizes = [8, 32], strides = [1, 1]} : vector<8x128xf32> to vector<8x32xf32>
    %118 = math.tanh %117 : vector<8x32xf32>
    %119 = vector.extract_strided_slice %116 {offsets = [0, 0], sizes = [8, 32], strides = [1, 1]} : vector<8x96xf32> to vector<8x32xf32>
    %120 = vector.extract_strided_slice %116 {offsets = [0, 32], sizes = [8, 32], strides = [1, 1]} : vector<8x96xf32> to vector<8x32xf32>
    %121 = vector.extract_strided_slice %116 {offsets = [0, 64], sizes = [8, 32], strides = [1, 1]} : vector<8x96xf32> to vector<8x32xf32>
    %122 = arith.mulf %120, %84 : vector<8x32xf32>
    %123 = arith.mulf %119, %118 : vector<8x32xf32>
    %124 = arith.addf %122, %123 : vector<8x32xf32>
    %125 = math.tanh %124 : vector<8x32xf32>
    %126 = arith.mulf %121, %125 : vector<8x32xf32>
    %127 = vector.extract_strided_slice %107 {offsets = [0, 128], sizes = [8, 64], strides = [1, 1]} : vector<8x192xf32> to vector<8x64xf32>
    %128 = vector.extract_strided_slice %127 {offsets = [0, 0], sizes = [8, 48], strides = [1, 1]} : vector<8x64xf32> to vector<8x48xf32>
    %129 = arith.negf %128 : vector<8x48xf32>
    %130 = math.exp %129 : vector<8x48xf32>
    %cst_21 = arith.constant 1.000000e+00 : f32
    %131 = vector.broadcast %cst_21 : f32 to vector<8x48xf32>
    %132 = arith.addf %131, %130 : vector<8x48xf32>
    %133 = arith.divf %131, %132 : vector<8x48xf32>
    %134 = vector.extract_strided_slice %127 {offsets = [0, 48], sizes = [8, 16], strides = [1, 1]} : vector<8x64xf32> to vector<8x16xf32>
    %135 = math.tanh %134 : vector<8x16xf32>
    %136 = vector.extract_strided_slice %133 {offsets = [0, 0], sizes = [8, 16], strides = [1, 1]} : vector<8x48xf32> to vector<8x16xf32>
    %137 = vector.extract_strided_slice %133 {offsets = [0, 16], sizes = [8, 16], strides = [1, 1]} : vector<8x48xf32> to vector<8x16xf32>
    %138 = vector.extract_strided_slice %133 {offsets = [0, 32], sizes = [8, 16], strides = [1, 1]} : vector<8x48xf32> to vector<8x16xf32>
    %139 = arith.mulf %137, %101 : vector<8x16xf32>
    %140 = arith.mulf %136, %135 : vector<8x16xf32>
    %141 = arith.addf %139, %140 : vector<8x16xf32>
    %142 = math.tanh %141 : vector<8x16xf32>
    %143 = arith.mulf %138, %142 : vector<8x16xf32>
    %144 = vector.extract_strided_slice %143 {offsets = [3, 0], sizes = [1, 16], strides = [1, 1]} : vector<8x16xf32> to vector<1x16xf32>
    %c2 = arith.constant 2 : index
    %c0_22 = arith.constant 0 : index
    %145 = vector.load %arg3[%c2, %c0_22] : memref<8x16xf32, #tpu.memory_space<vmem>>, vector<1x16xf32>
    tpu.vector_store %arg3[%c2, %c0_22], %144 {strides = array<i32>} : memref<8x16xf32, #tpu.memory_space<vmem>>, vector<1x16xf32>,
    %146 = tpu.concatenate %126, %143 in 1 : vector<8x32xf32>, vector<8x16xf32> -> vector<8x48xf32>
    %cst_23 = arith.constant dense<0.000000e+00> : vector<8x192xf32>
    %147 = tpu.matmul %146, %1, %cst_23 {dimension_numbers = #tpu.dot_dimension_numbers<[1], [0], [0], [1], [0, 0, 1, 1], [], []>} : vector<8x48xf32>, vector<48x192xf32>, vector<8x192xf32> -> vector<8x192xf32>
    %148 = vector.extract_strided_slice %147 {offsets = [0, 0], sizes = [8, 128], strides = [1, 1]} : vector<8x192xf32> to vector<8x128xf32>
    %149 = vector.extract_strided_slice %5 {offsets = [32, 0], sizes = [8, 128], strides = [1, 1]} : vector<64x128xf32> to vector<8x128xf32>
    %150 = arith.addf %148, %149 : vector<8x128xf32>
    %151 = vector.extract_strided_slice %150 {offsets = [0, 0], sizes = [8, 96], strides = [1, 1]} : vector<8x128xf32> to vector<8x96xf32>
    %152 = arith.negf %151 : vector<8x96xf32>
    %153 = math.exp %152 : vector<8x96xf32>
    %cst_24 = arith.constant 1.000000e+00 : f32
    %154 = vector.broadcast %cst_24 : f32 to vector<8x96xf32>
    %155 = arith.addf %154, %153 : vector<8x96xf32>
    %156 = arith.divf %154, %155 : vector<8x96xf32>
    %157 = vector.extract_strided_slice %150 {offsets = [0, 96], sizes = [8, 32], strides = [1, 1]} : vector<8x128xf32> to vector<8x32xf32>
    %158 = math.tanh %157 : vector<8x32xf32>
    %159 = vector.extract_strided_slice %156 {offsets = [0, 0], sizes = [8, 32], strides = [1, 1]} : vector<8x96xf32> to vector<8x32xf32>
    %160 = vector.extract_strided_slice %156 {offsets = [0, 32], sizes = [8, 32], strides = [1, 1]} : vector<8x96xf32> to vector<8x32xf32>
    %161 = vector.extract_strided_slice %156 {offsets = [0, 64], sizes = [8, 32], strides = [1, 1]} : vector<8x96xf32> to vector<8x32xf32>
    %162 = arith.mulf %160, %124 : vector<8x32xf32>
    %163 = arith.mulf %159, %158 : vector<8x32xf32>
    %164 = arith.addf %162, %163 : vector<8x32xf32>
    %165 = math.tanh %164 : vector<8x32xf32>
    %166 = arith.mulf %161, %165 : vector<8x32xf32>
    %167 = vector.extract_strided_slice %147 {offsets = [0, 128], sizes = [8, 64], strides = [1, 1]} : vector<8x192xf32> to vector<8x64xf32>
    %168 = vector.extract_strided_slice %167 {offsets = [0, 0], sizes = [8, 48], strides = [1, 1]} : vector<8x64xf32> to vector<8x48xf32>
    %169 = arith.negf %168 : vector<8x48xf32>
    %170 = math.exp %169 : vector<8x48xf32>
    %cst_25 = arith.constant 1.000000e+00 : f32
    %171 = vector.broadcast %cst_25 : f32 to vector<8x48xf32>
    %172 = arith.addf %171, %170 : vector<8x48xf32>
    %173 = arith.divf %171, %172 : vector<8x48xf32>
    %174 = vector.extract_strided_slice %167 {offsets = [0, 48], sizes = [8, 16], strides = [1, 1]} : vector<8x64xf32> to vector<8x16xf32>
    %175 = math.tanh %174 : vector<8x16xf32>
    %176 = vector.extract_strided_slice %173 {offsets = [0, 0], sizes = [8, 16], strides = [1, 1]} : vector<8x48xf32> to vector<8x16xf32>
    %177 = vector.extract_strided_slice %173 {offsets = [0, 16], sizes = [8, 16], strides = [1, 1]} : vector<8x48xf32> to vector<8x16xf32>
    %178 = vector.extract_strided_slice %173 {offsets = [0, 32], sizes = [8, 16], strides = [1, 1]} : vector<8x48xf32> to vector<8x16xf32>
    %179 = arith.mulf %177, %141 : vector<8x16xf32>
    %180 = arith.mulf %176, %175 : vector<8x16xf32>
    %181 = arith.addf %179, %180 : vector<8x16xf32>
    %182 = math.tanh %181 : vector<8x16xf32>
    %183 = arith.mulf %178, %182 : vector<8x16xf32>
    %184 = vector.extract_strided_slice %183 {offsets = [3, 0], sizes = [1, 16], strides = [1, 1]} : vector<8x16xf32> to vector<1x16xf32>
    %c3 = arith.constant 3 : index
    %c0_26 = arith.constant 0 : index
    %185 = vector.load %arg3[%c3, %c0_26] : memref<8x16xf32, #tpu.memory_space<vmem>>, vector<1x16xf32>
    tpu.vector_store %arg3[%c3, %c0_26], %184 {strides = array<i32>} : memref<8x16xf32, #tpu.memory_space<vmem>>, vector<1x16xf32>,
    %186 = tpu.concatenate %166, %183 in 1 : vector<8x32xf32>, vector<8x16xf32> -> vector<8x48xf32>
    %cst_27 = arith.constant dense<0.000000e+00> : vector<8x192xf32>
    %187 = tpu.matmul %186, %1, %cst_27 {dimension_numbers = #tpu.dot_dimension_numbers<[1], [0], [0], [1], [0, 0, 1, 1], [], []>} : vector<8x48xf32>, vector<48x192xf32>, vector<8x192xf32> -> vector<8x192xf32>
    %188 = vector.extract_strided_slice %187 {offsets = [0, 0], sizes = [8, 128], strides = [1, 1]} : vector<8x192xf32> to vector<8x128xf32>
    %189 = vector.extract_strided_slice %5 {offsets = [40, 0], sizes = [8, 128], strides = [1, 1]} : vector<64x128xf32> to vector<8x128xf32>
    %190 = arith.addf %188, %189 : vector<8x128xf32>
    %191 = vector.extract_strided_slice %190 {offsets = [0, 0], sizes = [8, 96], strides = [1, 1]} : vector<8x128xf32> to vector<8x96xf32>
    %192 = arith.negf %191 : vector<8x96xf32>
    %193 = math.exp %192 : vector<8x96xf32>
    %cst_28 = arith.constant 1.000000e+00 : f32
    %194 = vector.broadcast %cst_28 : f32 to vector<8x96xf32>
    %195 = arith.addf %194, %193 : vector<8x96xf32>
    %196 = arith.divf %194, %195 : vector<8x96xf32>
    %197 = vector.extract_strided_slice %190 {offsets = [0, 96], sizes = [8, 32], strides = [1, 1]} : vector<8x128xf32> to vector<8x32xf32>
    %198 = math.tanh %197 : vector<8x32xf32>
    %199 = vector.extract_strided_slice %196 {offsets = [0, 0], sizes = [8, 32], strides = [1, 1]} : vector<8x96xf32> to vector<8x32xf32>
    %200 = vector.extract_strided_slice %196 {offsets = [0, 32], sizes = [8, 32], strides = [1, 1]} : vector<8x96xf32> to vector<8x32xf32>
    %201 = vector.extract_strided_slice %196 {offsets = [0, 64], sizes = [8, 32], strides = [1, 1]} : vector<8x96xf32> to vector<8x32xf32>
    %202 = arith.mulf %200, %164 : vector<8x32xf32>
    %203 = arith.mulf %199, %198 : vector<8x32xf32>
    %204 = arith.addf %202, %203 : vector<8x32xf32>
    %205 = math.tanh %204 : vector<8x32xf32>
    %206 = arith.mulf %201, %205 : vector<8x32xf32>
    %207 = vector.extract_strided_slice %187 {offsets = [0, 128], sizes = [8, 64], strides = [1, 1]} : vector<8x192xf32> to vector<8x64xf32>
    %208 = vector.extract_strided_slice %207 {offsets = [0, 0], sizes = [8, 48], strides = [1, 1]} : vector<8x64xf32> to vector<8x48xf32>
    %209 = arith.negf %208 : vector<8x48xf32>
    %210 = math.exp %209 : vector<8x48xf32>
    %cst_29 = arith.constant 1.000000e+00 : f32
    %211 = vector.broadcast %cst_29 : f32 to vector<8x48xf32>
    %212 = arith.addf %211, %210 : vector<8x48xf32>
    %213 = arith.divf %211, %212 : vector<8x48xf32>
    %214 = vector.extract_strided_slice %207 {offsets = [0, 48], sizes = [8, 16], strides = [1, 1]} : vector<8x64xf32> to vector<8x16xf32>
    %215 = math.tanh %214 : vector<8x16xf32>
    %216 = vector.extract_strided_slice %213 {offsets = [0, 0], sizes = [8, 16], strides = [1, 1]} : vector<8x48xf32> to vector<8x16xf32>
    %217 = vector.extract_strided_slice %213 {offsets = [0, 16], sizes = [8, 16], strides = [1, 1]} : vector<8x48xf32> to vector<8x16xf32>
    %218 = vector.extract_strided_slice %213 {offsets = [0, 32], sizes = [8, 16], strides = [1, 1]} : vector<8x48xf32> to vector<8x16xf32>
    %219 = arith.mulf %217, %181 : vector<8x16xf32>
    %220 = arith.mulf %216, %215 : vector<8x16xf32>
    %221 = arith.addf %219, %220 : vector<8x16xf32>
    %222 = math.tanh %221 : vector<8x16xf32>
    %223 = arith.mulf %218, %222 : vector<8x16xf32>
    %224 = vector.extract_strided_slice %223 {offsets = [3, 0], sizes = [1, 16], strides = [1, 1]} : vector<8x16xf32> to vector<1x16xf32>
    %c4 = arith.constant 4 : index
    %c0_30 = arith.constant 0 : index
    %225 = vector.load %arg3[%c4, %c0_30] : memref<8x16xf32, #tpu.memory_space<vmem>>, vector<1x16xf32>
    tpu.vector_store %arg3[%c4, %c0_30], %224 {strides = array<i32>} : memref<8x16xf32, #tpu.memory_space<vmem>>, vector<1x16xf32>,
    %226 = tpu.concatenate %206, %223 in 1 : vector<8x32xf32>, vector<8x16xf32> -> vector<8x48xf32>
    %cst_31 = arith.constant dense<0.000000e+00> : vector<8x192xf32>
    %227 = tpu.matmul %226, %1, %cst_31 {dimension_numbers = #tpu.dot_dimension_numbers<[1], [0], [0], [1], [0, 0, 1, 1], [], []>} : vector<8x48xf32>, vector<48x192xf32>, vector<8x192xf32> -> vector<8x192xf32>
    %228 = vector.extract_strided_slice %227 {offsets = [0, 0], sizes = [8, 128], strides = [1, 1]} : vector<8x192xf32> to vector<8x128xf32>
    %229 = vector.extract_strided_slice %5 {offsets = [48, 0], sizes = [8, 128], strides = [1, 1]} : vector<64x128xf32> to vector<8x128xf32>
    %230 = arith.addf %228, %229 : vector<8x128xf32>
    %231 = vector.extract_strided_slice %230 {offsets = [0, 0], sizes = [8, 96], strides = [1, 1]} : vector<8x128xf32> to vector<8x96xf32>
    %232 = arith.negf %231 : vector<8x96xf32>
    %233 = math.exp %232 : vector<8x96xf32>
    %cst_32 = arith.constant 1.000000e+00 : f32
    %234 = vector.broadcast %cst_32 : f32 to vector<8x96xf32>
    %235 = arith.addf %234, %233 : vector<8x96xf32>
    %236 = arith.divf %234, %235 : vector<8x96xf32>
    %237 = vector.extract_strided_slice %230 {offsets = [0, 96], sizes = [8, 32], strides = [1, 1]} : vector<8x128xf32> to vector<8x32xf32>
    %238 = math.tanh %237 : vector<8x32xf32>
    %239 = vector.extract_strided_slice %236 {offsets = [0, 0], sizes = [8, 32], strides = [1, 1]} : vector<8x96xf32> to vector<8x32xf32>
    %240 = vector.extract_strided_slice %236 {offsets = [0, 32], sizes = [8, 32], strides = [1, 1]} : vector<8x96xf32> to vector<8x32xf32>
    %241 = vector.extract_strided_slice %236 {offsets = [0, 64], sizes = [8, 32], strides = [1, 1]} : vector<8x96xf32> to vector<8x32xf32>
    %242 = arith.mulf %240, %204 : vector<8x32xf32>
    %243 = arith.mulf %239, %238 : vector<8x32xf32>
    %244 = arith.addf %242, %243 : vector<8x32xf32>
    %245 = math.tanh %244 : vector<8x32xf32>
    %246 = arith.mulf %241, %245 : vector<8x32xf32>
    %247 = vector.extract_strided_slice %227 {offsets = [0, 128], sizes = [8, 64], strides = [1, 1]} : vector<8x192xf32> to vector<8x64xf32>
    %248 = vector.extract_strided_slice %247 {offsets = [0, 0], sizes = [8, 48], strides = [1, 1]} : vector<8x64xf32> to vector<8x48xf32>
    %249 = arith.negf %248 : vector<8x48xf32>
    %250 = math.exp %249 : vector<8x48xf32>
    %cst_33 = arith.constant 1.000000e+00 : f32
    %251 = vector.broadcast %cst_33 : f32 to vector<8x48xf32>
    %252 = arith.addf %251, %250 : vector<8x48xf32>
    %253 = arith.divf %251, %252 : vector<8x48xf32>
    %254 = vector.extract_strided_slice %247 {offsets = [0, 48], sizes = [8, 16], strides = [1, 1]} : vector<8x64xf32> to vector<8x16xf32>
    %255 = math.tanh %254 : vector<8x16xf32>
    %256 = vector.extract_strided_slice %253 {offsets = [0, 0], sizes = [8, 16], strides = [1, 1]} : vector<8x48xf32> to vector<8x16xf32>
    %257 = vector.extract_strided_slice %253 {offsets = [0, 16], sizes = [8, 16], strides = [1, 1]} : vector<8x48xf32> to vector<8x16xf32>
    %258 = vector.extract_strided_slice %253 {offsets = [0, 32], sizes = [8, 16], strides = [1, 1]} : vector<8x48xf32> to vector<8x16xf32>
    %259 = arith.mulf %257, %221 : vector<8x16xf32>
    %260 = arith.mulf %256, %255 : vector<8x16xf32>
    %261 = arith.addf %259, %260 : vector<8x16xf32>
    %262 = math.tanh %261 : vector<8x16xf32>
    %263 = arith.mulf %258, %262 : vector<8x16xf32>
    %264 = vector.extract_strided_slice %263 {offsets = [3, 0], sizes = [1, 16], strides = [1, 1]} : vector<8x16xf32> to vector<1x16xf32>
    %c5 = arith.constant 5 : index
    %c0_34 = arith.constant 0 : index
    %265 = vector.load %arg3[%c5, %c0_34] : memref<8x16xf32, #tpu.memory_space<vmem>>, vector<1x16xf32>
    tpu.vector_store %arg3[%c5, %c0_34], %264 {strides = array<i32>} : memref<8x16xf32, #tpu.memory_space<vmem>>, vector<1x16xf32>,
    %266 = tpu.concatenate %246, %263 in 1 : vector<8x32xf32>, vector<8x16xf32> -> vector<8x48xf32>
    %cst_35 = arith.constant dense<0.000000e+00> : vector<8x192xf32>
    %267 = tpu.matmul %266, %1, %cst_35 {dimension_numbers = #tpu.dot_dimension_numbers<[1], [0], [0], [1], [0, 0, 1, 1], [], []>} : vector<8x48xf32>, vector<48x192xf32>, vector<8x192xf32> -> vector<8x192xf32>
    %268 = vector.extract_strided_slice %267 {offsets = [0, 0], sizes = [8, 128], strides = [1, 1]} : vector<8x192xf32> to vector<8x128xf32>
    %269 = vector.extract_strided_slice %5 {offsets = [56, 0], sizes = [8, 128], strides = [1, 1]} : vector<64x128xf32> to vector<8x128xf32>
    %270 = arith.addf %268, %269 : vector<8x128xf32>
    %271 = vector.extract_strided_slice %270 {offsets = [0, 0], sizes = [8, 96], strides = [1, 1]} : vector<8x128xf32> to vector<8x96xf32>
    %272 = arith.negf %271 : vector<8x96xf32>
    %273 = math.exp %272 : vector<8x96xf32>
    %cst_36 = arith.constant 1.000000e+00 : f32
    %274 = vector.broadcast %cst_36 : f32 to vector<8x96xf32>
    %275 = arith.addf %274, %273 : vector<8x96xf32>
    %276 = arith.divf %274, %275 : vector<8x96xf32>
    %277 = vector.extract_strided_slice %270 {offsets = [0, 96], sizes = [8, 32], strides = [1, 1]} : vector<8x128xf32> to vector<8x32xf32>
    %278 = math.tanh %277 : vector<8x32xf32>
    %279 = vector.extract_strided_slice %276 {offsets = [0, 0], sizes = [8, 32], strides = [1, 1]} : vector<8x96xf32> to vector<8x32xf32>
    %280 = vector.extract_strided_slice %276 {offsets = [0, 32], sizes = [8, 32], strides = [1, 1]} : vector<8x96xf32> to vector<8x32xf32>
    %281 = vector.extract_strided_slice %276 {offsets = [0, 64], sizes = [8, 32], strides = [1, 1]} : vector<8x96xf32> to vector<8x32xf32>
    %282 = arith.mulf %280, %244 : vector<8x32xf32>
    %283 = arith.mulf %279, %278 : vector<8x32xf32>
    %284 = arith.addf %282, %283 : vector<8x32xf32>
    %285 = math.tanh %284 : vector<8x32xf32>
    %286 = arith.mulf %281, %285 : vector<8x32xf32>
    %287 = vector.extract_strided_slice %267 {offsets = [0, 128], sizes = [8, 64], strides = [1, 1]} : vector<8x192xf32> to vector<8x64xf32>
    %288 = vector.extract_strided_slice %287 {offsets = [0, 0], sizes = [8, 48], strides = [1, 1]} : vector<8x64xf32> to vector<8x48xf32>
    %289 = arith.negf %288 : vector<8x48xf32>
    %290 = math.exp %289 : vector<8x48xf32>
    %cst_37 = arith.constant 1.000000e+00 : f32
    %291 = vector.broadcast %cst_37 : f32 to vector<8x48xf32>
    %292 = arith.addf %291, %290 : vector<8x48xf32>
    %293 = arith.divf %291, %292 : vector<8x48xf32>
    %294 = vector.extract_strided_slice %287 {offsets = [0, 48], sizes = [8, 16], strides = [1, 1]} : vector<8x64xf32> to vector<8x16xf32>
    %295 = math.tanh %294 : vector<8x16xf32>
    %296 = vector.extract_strided_slice %293 {offsets = [0, 0], sizes = [8, 16], strides = [1, 1]} : vector<8x48xf32> to vector<8x16xf32>
    %297 = vector.extract_strided_slice %293 {offsets = [0, 16], sizes = [8, 16], strides = [1, 1]} : vector<8x48xf32> to vector<8x16xf32>
    %298 = vector.extract_strided_slice %293 {offsets = [0, 32], sizes = [8, 16], strides = [1, 1]} : vector<8x48xf32> to vector<8x16xf32>
    %299 = arith.mulf %297, %261 : vector<8x16xf32>
    %300 = arith.mulf %296, %295 : vector<8x16xf32>
    %301 = arith.addf %299, %300 : vector<8x16xf32>
    %302 = math.tanh %301 : vector<8x16xf32>
    %303 = arith.mulf %298, %302 : vector<8x16xf32>
    %304 = vector.extract_strided_slice %303 {offsets = [3, 0], sizes = [1, 16], strides = [1, 1]} : vector<8x16xf32> to vector<1x16xf32>
    %c6 = arith.constant 6 : index
    %c0_38 = arith.constant 0 : index
    %305 = vector.load %arg3[%c6, %c0_38] : memref<8x16xf32, #tpu.memory_space<vmem>>, vector<1x16xf32>
    tpu.vector_store %arg3[%c6, %c0_38], %304 {strides = array<i32>} : memref<8x16xf32, #tpu.memory_space<vmem>>, vector<1x16xf32>,
    %306 = tpu.concatenate %286, %303 in 1 : vector<8x32xf32>, vector<8x16xf32> -> vector<8x48xf32>
    %cst_39 = arith.constant dense<0.000000e+00> : vector<8x192xf32>
    %307 = tpu.matmul %306, %1, %cst_39 {dimension_numbers = #tpu.dot_dimension_numbers<[1], [0], [0], [1], [0, 0, 1, 1], [], []>} : vector<8x48xf32>, vector<48x192xf32>, vector<8x192xf32> -> vector<8x192xf32>
    %308 = vector.extract_strided_slice %307 {offsets = [0, 128], sizes = [8, 64], strides = [1, 1]} : vector<8x192xf32> to vector<8x64xf32>
    %309 = vector.extract_strided_slice %308 {offsets = [0, 0], sizes = [8, 48], strides = [1, 1]} : vector<8x64xf32> to vector<8x48xf32>
    %310 = arith.negf %309 : vector<8x48xf32>
    %311 = math.exp %310 : vector<8x48xf32>
    %cst_40 = arith.constant 1.000000e+00 : f32
    %312 = vector.broadcast %cst_40 : f32 to vector<8x48xf32>
    %313 = arith.addf %312, %311 : vector<8x48xf32>
    %314 = arith.divf %312, %313 : vector<8x48xf32>
    %315 = vector.extract_strided_slice %308 {offsets = [0, 48], sizes = [8, 16], strides = [1, 1]} : vector<8x64xf32> to vector<8x16xf32>
    %316 = math.tanh %315 : vector<8x16xf32>
    %317 = vector.extract_strided_slice %314 {offsets = [0, 0], sizes = [8, 16], strides = [1, 1]} : vector<8x48xf32> to vector<8x16xf32>
    %318 = vector.extract_strided_slice %314 {offsets = [0, 16], sizes = [8, 16], strides = [1, 1]} : vector<8x48xf32> to vector<8x16xf32>
    %319 = vector.extract_strided_slice %314 {offsets = [0, 32], sizes = [8, 16], strides = [1, 1]} : vector<8x48xf32> to vector<8x16xf32>
    %320 = arith.mulf %318, %301 : vector<8x16xf32>
    %321 = arith.mulf %317, %316 : vector<8x16xf32>
    %322 = arith.addf %320, %321 : vector<8x16xf32>
    %323 = math.tanh %322 : vector<8x16xf32>
    %324 = arith.mulf %319, %323 : vector<8x16xf32>
    %325 = vector.extract_strided_slice %324 {offsets = [3, 0], sizes = [1, 16], strides = [1, 1]} : vector<8x16xf32> to vector<1x16xf32>
    %c7 = arith.constant 7 : index
    %c0_41 = arith.constant 0 : index
    %326 = vector.load %arg3[%c7, %c0_41] : memref<8x16xf32, #tpu.memory_space<vmem>>, vector<1x16xf32>
    tpu.vector_store %arg3[%c7, %c0_41], %325 {strides = array<i32>} : memref<8x16xf32, #tpu.memory_space<vmem>>, vector<1x16xf32>,
    %c0_42 = arith.constant 0 : index
    %c0_43 = arith.constant 0 : index
    %327 = vector.load %arg3[%c0_42, %c0_43] : memref<8x16xf32, #tpu.memory_space<vmem>>, vector<8x16xf32>
    %cst_44 = arith.constant dense<0.000000e+00> : vector<8x128xf32>
    %328 = tpu.matmul %327, %2, %cst_44 {dimension_numbers = #tpu.dot_dimension_numbers<[1], [0], [0], [1], [0, 0, 1, 1], [], []>} : vector<8x16xf32>, vector<16x128xf32>, vector<8x128xf32> -> vector<8x128xf32>
    %329 = vector.broadcast %3 : vector<1x128xf32> to vector<8x128xf32>
    %330 = arith.addf %328, %329 : vector<8x128xf32>
    %c0_45 = arith.constant 0 : index
    %c0_46 = arith.constant 0 : index
    %331 = vector.load %arg2[%c0_45, %c0_46] : memref<8x128xf32, #tpu.memory_space<vmem>>, vector<8x128xf32>
    tpu.vector_store %arg2[%c0_45, %c0_46], %330 {strides = array<i32>} : memref<8x128xf32, #tpu.memory_space<vmem>>, vector<8x128xf32>,
    return
  }
}

</mosaic_0001>

<llo_original>
// kernel: tpu_custom_call.1
$region0: #{tpu_custom_call.1}
  #allocation0 [shape = 'u32[]', space=smem, size = 0x4, offset = 0x4, fixed_abs, tag = 'smem constant byte address 0x4 - core index']
  #allocation1 [shape = 'u32[72,128]{1,0:T(1,128)}', space=vmem, size = 0x9000, scoped, tag = 'internal scratch']
  #allocation2 [shape = 'f32[8,16]{1,0:T(8,128)}', space=vmem, size = 0x1000, scoped, tag = 'scratch operand']
  %s0 = inlined_call_operand.vmem [shape: f32[64,32], index: 0, kind: input, shape index: {}]
  %s1 = inlined_call_operand.vmem [shape: f32[104,192], index: 1, kind: input, shape index: {}]
  %s2 = inlined_call_operand.hbm [shape: f32[8,128], index: 2, kind: output, shape index: {}]
  %s3 = sld [smem:[#allocation0]]
  $region18: #{tpu_custom_call.1} parent=0
    _
  %s5 = ssub.s32 1, %s3
  %s6 = scalar_select 0, %s5, %s3
  $region1: #{tpu_custom_call.1} parent=0
    #allocation3 [shape = 'u8[4096]{0}', space=vmem, size = 0x1000, scoped, tag = 'output window, operand 0, single buffered']
    #allocation4 [shape = 's32[1]{0}', space=sflag, size = 0x4, scoped, tag = 'scoped memory for tpu_custom_call.1']
    %7 = vsyncpa [#allocation4], 0
    // Predicated region
    $region2: #{tpu_custom_call.1} parent=1 // pred_check
      _
    $region3: #{tpu_custom_call.1} parent=1 // pred_check_branch
      %9 = sbr.rel (0) target = $region5
    $region4: #{tpu_custom_call.1} parent=1 // pred_region
      _
    $region5: #{tpu_custom_call.1} parent=1 // pred_fallthru
      _
    // Predicated region
    $region6: #{tpu_custom_call.1} parent=1 // pred_check
      _
    $region7: #{tpu_custom_call.1} parent=1 // pred_check_branch
      %11 = sbr.rel (0) target = $region9
    $region8: #{tpu_custom_call.1} parent=1 // pred_region
      _
    $region9: #{tpu_custom_call.1} parent=1 // pred_fallthru
      _
    %v12 = vld [vmem:[%s1] sm:$0xff]
    %v13 = vld [vmem:[%s1 + $0x10] sm:$0xff]
    %v14 = vld [vmem:[%s1 + $0x20] sm:$0xff]
    %v15 = vld [vmem:[%s1 + $0x30] sm:$0xff]
    %v16 = vld [vmem:[%s1 + $0x40] sm:$0xff]
    %v17 = vld [vmem:[%s1 + $0x48] sm:$0xff]
    %v18 = vld [vmem:[%s1 + $0x50] sm:$0xff]
    %v19 = vld [vmem:[%s1 + $0x58] sm:$0xff]
    %v20 = vld [vmem:[%s1 + $0x60] sm:$0xff]
    %v21 = vld [vmem:[%s1 + $0x68] sm:$0xff]
    %v22 = vld [vmem:[%s1 + $0x70] sm:$0xff]
    %v23 = vld [vmem:[%s1 + $0x78] sm:$0xff]
    %v24 = vld [vmem:[%s1 + $0x80] sm:$0xff]
    %v25 = vld [vmem:[%s1 + $0x88] sm:$0xff]
    %v26 = vld [vmem:[%s1 + $0x90] sm:$0xff]
    %v27 = vld [vmem:[%s1 + $0x98] sm:$0xff]
    %v28 = vld [vmem:[%s1 + $0xa0] sm:$0xff]
    %v29 = vld [vmem:[%s1 + $0xb0] sm:$0xff]
    %v30 = vld [vmem:[%s1 + $0xc0] ss:$0 sm:$0xff]
    %v31 = vld [vmem:[%s0] sm:$0xff]
    %v32 = vld [vmem:[%s0 + $0x8] sm:$0xff]
    %v33 = vld [vmem:[%s0 + $0x10] sm:$0xff]
    %v34 = vld [vmem:[%s0 + $0x18] sm:$0xff]
    %v35 = vld [vmem:[%s0 + $0x20] sm:$0xff]
    %v36 = vld [vmem:[%s0 + $0x28] sm:$0xff]
    %v37 = vld [vmem:[%s0 + $0x30] sm:$0xff]
    %v38 = vld [vmem:[%s0 + $0x38] sm:$0xff]
    %vm39 = vcmask 261120
    %v41 = vsel %vm39, %v31, 0
    %v44 = vsel %vm39, %v32, 0
    %v47 = vsel %vm39, %v33, 0
    %v50 = vsel %vm39, %v34, 0
    %v53 = vsel %vm39, %v35, 0
    %v56 = vsel %vm39, %v36, 0
    %v59 = vsel %vm39, %v37, 0
    %v62 = vsel %vm39, %v38, 0
    %64 = vmatpush.msra.mxu0 0.0
    %65 = vmatpush.msra.mxu0 0.0
    %66 = vmatpush.msra.mxu0 0.0
    %67 = vmatpush.msra.mxu0 0.0
    %68 = vmatpush.msra.mxu0 0.0
    %69 = vmatpush.msra.mxu0 0.0
    %70 = vmatpush.msra.mxu0 0.0
    %71 = vmatpush.msra.mxu0 0.0
    %72 = vmatpush.msra.mxu0 0.0
    %73 = vmatpush.msra.mxu0 0.0
    %74 = vmatpush.msra.mxu0 0.0
    %75 = vmatpush.msra.mxu0 0.0
    %76 = vmatpush.msra.mxu0 %v15
    %77 = vmatpush.msra.mxu0 %v14
    %78 = vmatpush.msra.mxu0 %v13
    %79 = vmatpush.msra.mxu0 %v12
    %80 = vmatmul.f32.gmra.mxu0 %v41
    %v81 = vpop.f32.mrf.mxu0
    %v82 = vadd.f32 0.0, %v81
    %83 = vmatmul.f32.gmra.mxu0 %v44
    %v84 = vpop.f32.mrf.mxu0
    %v85 = vadd.f32 0.0, %v84
    %86 = vmatmul.f32.gmra.mxu0 %v47
    %v87 = vpop.f32.mrf.mxu0
    %v88 = vadd.f32 0.0, %v87
    %89 = vmatmul.f32.gmra.mxu0 %v50
    %v90 = vpop.f32.mrf.mxu0
    %v91 = vadd.f32 0.0, %v90
    %92 = vmatmul.f32.gmra.mxu0 %v53
    %v93 = vpop.f32.mrf.mxu0
    %v94 = vadd.f32 0.0, %v93
    %95 = vmatmul.f32.gmra.mxu0 %v56
    %v96 = vpop.f32.mrf.mxu0
    %v97 = vadd.f32 0.0, %v96
    %98 = vmatmul.f32.gmra.mxu0 %v59
    %v99 = vpop.f32.mrf.mxu0
    %v100 = vadd.f32 0.0, %v99
    %101 = vmatmul.f32.gmra.mxu0 %v62
    %v102 = vpop.f32.mrf.mxu0
    %v103 = vadd.f32 0.0, %v102
    %104 = vdwg.mxu0
    %v105 = vxor.u32 %v82, 2147483648
    %v106 = vmul.f32 %v105, 1.442695
    %v107 = vpow.pop %v106
    %v108 = vadd.f32 %v107, 1.0
    %v109 = vrcp.pop %v108
    %v110 = vmul.f32 %v108, %v109
    %v111 = vsub.f32 1.0, %v110
    %v112 = vmul.f32 %v109, %v111
    %v113 = vadd.f32 %v109, %v112
    %vm114 = vweird.f32 %v108
    %vm115 = vweird.f32 %v109
    %vm116 = vmor %vm114, %vm115
    %v117 = vsel %vm116, %v109, %v113
    %v118 = vand.u32 2147483647, %v108
    %vm119 = vcmp.eq.f32.partialorder %v118, 8.507059e+37
    %v120 = vand.u32 %v108, 2147483648
    %v121 = vor.u32 1.1754944e-38, %v120
    %v122 = vsel %vm119, %v121, %v117
    %v123 = vmul.f32 1.0, %v122
    %v124 = vtanh.pop %v82
    %v125 = vmul.f32 %v123, 0.0
    %127 = vrot.lane.b32.xlu0 %v124, 32
    %v128 = vpop.permute.xlu0 %127
    %v130 = vmul.f32 %v123, %v128
    %132 = vrot.lane.b32.xlu0 %v130, 32
    %v133 = vpop.permute.xlu0 %132
    %v135 = vadd.f32 %v125, %v133
    %v136 = vtanh.pop %v135
    %138 = vrot.lane.b32.xlu0 %v136, 32
    %v139 = vpop.permute.xlu0 %138
    %v141 = vmul.f32 %v123, %v139
    %143 = vrot.lane.b32.xlu0 %v141, 64
    %v144 = vpop.permute.xlu0 %143
    %v146 = vsel %vm39, %v144, 0.0
    %vm147 = vcmask 392192
    %v149 = vsel %vm147, %v146, 0
    %151 = vmatpush.msra.mxu0 0.0
    %152 = vmatpush.msra.mxu0 0.0
    %153 = vmatpush.msra.mxu0 0.0
    %154 = vmatpush.msra.mxu0 0.0
    %155 = vmatpush.msra.mxu0 0.0
    %156 = vmatpush.msra.mxu0 0.0
    %157 = vmatpush.msra.mxu0 0.0
    %158 = vmatpush.msra.mxu0 0.0
    %159 = vmatpush.msra.mxu0 0.0
    %160 = vmatpush.msra.mxu0 0.0
    %161 = vmatpush.msra.mxu0 %v26
    %162 = vmatpush.msra.mxu0 %v24
    %163 = vmatpush.msra.mxu0 %v22
    %164 = vmatpush.msra.mxu0 %v20
    %165 = vmatpush.msra.mxu0 %v18
    %166 = vmatpush.msra.mxu0 %v16
    %167 = vmatmul.f32.gmra.mxu0 %v149
    %v168 = vpop.f32.mrf.mxu0
    %v169 = vadd.f32 0.0, %v168
    %170 = vdwg.mxu0
    %171 = vmatpush.msra.mxu0 0.0
    %172 = vmatpush.msra.mxu0 0.0
    %173 = vmatpush.msra.mxu0 0.0
    %174 = vmatpush.msra.mxu0 0.0
    %175 = vmatpush.msra.mxu0 0.0
    %176 = vmatpush.msra.mxu0 0.0
    %177 = vmatpush.msra.mxu0 0.0
    %178 = vmatpush.msra.mxu0 0.0
    %179 = vmatpush.msra.mxu0 0.0
    %180 = vmatpush.msra.mxu0 0.0
    %181 = vmatpush.msra.mxu0 %v27
    %182 = vmatpush.msra.mxu0 %v25
    %183 = vmatpush.msra.mxu0 %v23
    %184 = vmatpush.msra.mxu0 %v21
    %185 = vmatpush.msra.mxu0 %v19
    %186 = vmatpush.msra.mxu0 %v17
    %187 = vmatmul.f32.gmra.mxu0 %v149
    %v188 = vpop.f32.mrf.mxu0
    %v189 = vadd.f32 0.0, %v188
    %190 = vdwg.mxu0
    %v191 = vadd.f32 %v169, %v85
    %v192 = vxor.u32 %v191, 2147483648
    %v193 = vmul.f32 %v192, 1.442695
    %v194 = vpow.pop %v193
    %v195 = vadd.f32 %v194, 1.0
    %v196 = vrcp.pop %v195
    %v197 = vmul.f32 %v195, %v196
    %v198 = vsub.f32 1.0, %v197
    %v199 = vmul.f32 %v196, %v198
    %v200 = vadd.f32 %v196, %v199
    %vm201 = vweird.f32 %v195
    %vm202 = vweird.f32 %v196
    %vm203 = vmor %vm201, %vm202
    %v204 = vsel %vm203, %v196, %v200
    %v205 = vand.u32 2147483647, %v195
    %vm206 = vcmp.eq.f32.partialorder %v205, 8.507059e+37
    %v207 = vand.u32 %v195, 2147483648
    %v208 = vor.u32 1.1754944e-38, %v207
    %v209 = vsel %vm206, %v208, %v204
    %v210 = vmul.f32 1.0, %v209
    %v211 = vtanh.pop %v191
    %v212 = vmul.f32 %v210, %v135
    %214 = vrot.lane.b32.xlu0 %v211, 32
    %v215 = vpop.permute.xlu0 %214
    %v217 = vmul.f32 %v210, %v215
    %219 = vrot.lane.b32.xlu0 %v217, 32
    %v220 = vpop.permute.xlu0 %219
    %v222 = vadd.f32 %v212, %v220
    %v223 = vtanh.pop %v222
    %225 = vrot.lane.b32.xlu0 %v223, 32
    %v226 = vpop.permute.xlu0 %225
    %v228 = vmul.f32 %v210, %v226
    %v229 = vxor.u32 %v189, 2147483648
    %v230 = vmul.f32 %v229, 1.442695
    %v231 = vpow.pop %v230
    %v232 = vadd.f32 %v231, 1.0
    %v233 = vrcp.pop %v232
    %v234 = vmul.f32 %v232, %v233
    %v235 = vsub.f32 1.0, %v234
    %v236 = vmul.f32 %v233, %v235
    %v237 = vadd.f32 %v233, %v236
    %vm238 = vweird.f32 %v232
    %vm239 = vweird.f32 %v233
    %vm240 = vmor %vm238, %vm239
    %v241 = vsel %vm240, %v233, %v237
    %v242 = vand.u32 2147483647, %v232
    %vm243 = vcmp.eq.f32.partialorder %v242, 8.507059e+37
    %v244 = vand.u32 %v232, 2147483648
    %v245 = vor.u32 1.1754944e-38, %v244
    %v246 = vsel %vm243, %v245, %v241
    %v247 = vmul.f32 1.0, %v246
    %v248 = vtanh.pop %v189
    %v249 = vmul.f32 %v247, 0.0
    %251 = vrot.lane.b32.xlu0 %v248, 80
    %v252 = vpop.permute.xlu0 %251
    %v254 = vmul.f32 %v247, %v252
    %256 = vrot.lane.b32.xlu0 %v254, 16
    %v257 = vpop.permute.xlu0 %256
    %v259 = vadd.f32 %v249, %v257
    %v260 = vtanh.pop %v259
    %262 = vrot.lane.b32.xlu0 %v260, 16
    %v263 = vpop.permute.xlu0 %262
    %v265 = vmul.f32 %v247, %v263
    %267 = vrot.lane.b32.xlu0 %v265, 96
    %v268 = vpop.permute.xlu0 %267
    %vm270 = vcmask 125955
    %271 = vst.msk [vmem:[#allocation2 - $0x3] sm:$0x8] %vm270, %v268
    %273 = vrot.lane.b32.xlu0 %v228, 64
    %v274 = vpop.permute.xlu0 %273
    %v276 = vsel %vm39, %v274, %v265
    %v278 = vsel %vm147, %v276, 0
    %280 = vmatpush.msra.mxu0 0.0
    %281 = vmatpush.msra.mxu0 0.0
    %282 = vmatpush.msra.mxu0 0.0
    %283 = vmatpush.msra.mxu0 0.0
    %284 = vmatpush.msra.mxu0 0.0
    %285 = vmatpush.msra.mxu0 0.0
    %286 = vmatpush.msra.mxu0 0.0
    %287 = vmatpush.msra.mxu0 0.0
    %288 = vmatpush.msra.mxu0 0.0
    %289 = vmatpush.msra.mxu0 0.0
    %290 = vmatpush.msra.mxu0 %v26
    %291 = vmatpush.msra.mxu0 %v24
    %292 = vmatpush.msra.mxu0 %v22
    %293 = vmatpush.msra.mxu0 %v20
    %294 = vmatpush.msra.mxu0 %v18
    %295 = vmatpush.msra.mxu0 %v16
    %296 = vmatmul.f32.gmra.mxu0 %v278
    %v297 = vpop.f32.mrf.mxu0
    %v298 = vadd.f32 0.0, %v297
    %299 = vdwg.mxu0
    %300 = vmatpush.msra.mxu0 0.0
    %301 = vmatpush.msra.mxu0 0.0
    %302 = vmatpush.msra.mxu0 0.0
    %303 = vmatpush.msra.mxu0 0.0
    %304 = vmatpush.msra.mxu0 0.0
    %305 = vmatpush.msra.mxu0 0.0
    %306 = vmatpush.msra.mxu0 0.0
    %307 = vmatpush.msra.mxu0 0.0
    %308 = vmatpush.msra.mxu0 0.0
    %309 = vmatpush.msra.mxu0 0.0
    %310 = vmatpush.msra.mxu0 %v27
    %311 = vmatpush.msra.mxu0 %v25
    %312 = vmatpush.msra.mxu0 %v23
    %313 = vmatpush.msra.mxu0 %v21
    %314 = vmatpush.msra.mxu0 %v19
    %315 = vmatpush.msra.mxu0 %v17
    %316 = vmatmul.f32.gmra.mxu0 %v278
    %v317 = vpop.f32.mrf.mxu0
    %v318 = vadd.f32 0.0, %v317
    %319 = vdwg.mxu0
    %v320 = vadd.f32 %v298, %v88
    %v321 = vxor.u32 %v320, 2147483648
    %v322 = vmul.f32 %v321, 1.442695
    %v323 = vpow.pop %v322
    %v324 = vadd.f32 %v323, 1.0
    %v325 = vrcp.pop %v324
    %v326 = vmul.f32 %v324, %v325
    %v327 = vsub.f32 1.0, %v326
    %v328 = vmul.f32 %v325, %v327
    %v329 = vadd.f32 %v325, %v328
    %vm330 = vweird.f32 %v324
    %vm331 = vweird.f32 %v325
    %vm332 = vmor %vm330, %vm331
    %v333 = vsel %vm332, %v325, %v329
    %v334 = vand.u32 2147483647, %v324
    %vm335 = vcmp.eq.f32.partialorder %v334, 8.507059e+37
    %v336 = vand.u32 %v324, 2147483648
    %v337 = vor.u32 1.1754944e-38, %v336
    %v338 = vsel %vm335, %v337, %v333
    %v339 = vmul.f32 1.0, %v338
    %v340 = vtanh.pop %v320
    %v341 = vmul.f32 %v339, %v222
    %343 = vrot.lane.b32.xlu0 %v340, 32
    %v344 = vpop.permute.xlu0 %343
    %v346 = vmul.f32 %v339, %v344
    %348 = vrot.lane.b32.xlu0 %v346, 32
    %v349 = vpop.permute.xlu0 %348
    %v351 = vadd.f32 %v341, %v349
    %v352 = vtanh.pop %v351
    %354 = vrot.lane.b32.xlu0 %v352, 32
    %v355 = vpop.permute.xlu0 %354
    %v357 = vmul.f32 %v339, %v355
    %v358 = vxor.u32 %v318, 2147483648
    %v359 = vmul.f32 %v358, 1.442695
    %v360 = vpow.pop %v359
    %v361 = vadd.f32 %v360, 1.0
    %v362 = vrcp.pop %v361
    %v363 = vmul.f32 %v361, %v362
    %v364 = vsub.f32 1.0, %v363
    %v365 = vmul.f32 %v362, %v364
    %v366 = vadd.f32 %v362, %v365
    %vm367 = vweird.f32 %v361
    %vm368 = vweird.f32 %v362
    %vm369 = vmor %vm367, %vm368
    %v370 = vsel %vm369, %v362, %v366
    %v371 = vand.u32 2147483647, %v361
    %vm372 = vcmp.eq.f32.partialorder %v371, 8.507059e+37
    %v373 = vand.u32 %v361, 2147483648
    %v374 = vor.u32 1.1754944e-38, %v373
    %v375 = vsel %vm372, %v374, %v370
    %v376 = vmul.f32 1.0, %v375
    %v377 = vtanh.pop %v318
    %v378 = vmul.f32 %v376, %v259
    %380 = vrot.lane.b32.xlu0 %v377, 80
    %v381 = vpop.permute.xlu0 %380
    %v383 = vmul.f32 %v376, %v381
    %385 = vrot.lane.b32.xlu0 %v383, 16
    %v386 = vpop.permute.xlu0 %385
    %v388 = vadd.f32 %v378, %v386
    %v389 = vtanh.pop %v388
    %391 = vrot.lane.b32.xlu0 %v389, 16
    %v392 = vpop.permute.xlu0 %391
    %v394 = vmul.f32 %v376, %v392
    %396 = vrot.lane.b32.xlu0 %v394, 96
    %v397 = vpop.permute.xlu0 %396
    %399 = vst.msk [vmem:[#allocation2 - $0x2] sm:$0x8] %vm270, %v397
    %401 = vrot.lane.b32.xlu0 %v357, 64
    %v402 = vpop.permute.xlu0 %401
    %v404 = vsel %vm39, %v402, %v394
    %v406 = vsel %vm147, %v404, 0
    %408 = vmatpush.msra.mxu0 0.0
    %409 = vmatpush.msra.mxu0 0.0
    %410 = vmatpush.msra.mxu0 0.0
    %411 = vmatpush.msra.mxu0 0.0
    %412 = vmatpush.msra.mxu0 0.0
    %413 = vmatpush.msra.mxu0 0.0
    %414 = vmatpush.msra.mxu0 0.0
    %415 = vmatpush.msra.mxu0 0.0
    %416 = vmatpush.msra.mxu0 0.0
    %417 = vmatpush.msra.mxu0 0.0
    %418 = vmatpush.msra.mxu0 %v26
    %419 = vmatpush.msra.mxu0 %v24
    %420 = vmatpush.msra.mxu0 %v22
    %421 = vmatpush.msra.mxu0 %v20
    %422 = vmatpush.msra.mxu0 %v18
    %423 = vmatpush.msra.mxu0 %v16
    %424 = vmatmul.f32.gmra.mxu0 %v406
    %v425 = vpop.f32.mrf.mxu0
    %v426 = vadd.f32 0.0, %v425
    %427 = vdwg.mxu0
    %428 = vmatpush.msra.mxu0 0.0
    %429 = vmatpush.msra.mxu0 0.0
    %430 = vmatpush.msra.mxu0 0.0
    %431 = vmatpush.msra.mxu0 0.0
    %432 = vmatpush.msra.mxu0 0.0
    %433 = vmatpush.msra.mxu0 0.0
    %434 = vmatpush.msra.mxu0 0.0
    %435 = vmatpush.msra.mxu0 0.0
    %436 = vmatpush.msra.mxu0 0.0
    %437 = vmatpush.msra.mxu0 0.0
    %438 = vmatpush.msra.mxu0 %v27
    %439 = vmatpush.msra.mxu0 %v25
    %440 = vmatpush.msra.mxu0 %v23
    %441 = vmatpush.msra.mxu0 %v21
    %442 = vmatpush.msra.mxu0 %v19
    %443 = vmatpush.msra.mxu0 %v17
    %444 = vmatmul.f32.gmra.mxu0 %v406
    %v445 = vpop.f32.mrf.mxu0
    %v446 = vadd.f32 0.0, %v445
    %447 = vdwg.mxu0
    %v448 = vadd.f32 %v426, %v91
    %v449 = vxor.u32 %v448, 2147483648
    %v450 = vmul.f32 %v449, 1.442695
    %v451 = vpow.pop %v450
    %v452 = vadd.f32 %v451, 1.0
    %v453 = vrcp.pop %v452
    %v454 = vmul.f32 %v452, %v453
    %v455 = vsub.f32 1.0, %v454
    %v456 = vmul.f32 %v453, %v455
    %v457 = vadd.f32 %v453, %v456
    %vm458 = vweird.f32 %v452
    %vm459 = vweird.f32 %v453
    %vm460 = vmor %vm458, %vm459
    %v461 = vsel %vm460, %v453, %v457
    %v462 = vand.u32 2147483647, %v452
    %vm463 = vcmp.eq.f32.partialorder %v462, 8.507059e+37
    %v464 = vand.u32 %v452, 2147483648
    %v465 = vor.u32 1.1754944e-38, %v464
    %v466 = vsel %vm463, %v465, %v461
    %v467 = vmul.f32 1.0, %v466
    %v468 = vtanh.pop %v448
    %v469 = vmul.f32 %v467, %v351
    %471 = vrot.lane.b32.xlu0 %v468, 32
    %v472 = vpop.permute.xlu0 %471
    %v474 = vmul.f32 %v467, %v472
    %476 = vrot.lane.b32.xlu0 %v474, 32
    %v477 = vpop.permute.xlu0 %476
    %v479 = vadd.f32 %v469, %v477
    %v480 = vtanh.pop %v479
    %482 = vrot.lane.b32.xlu0 %v480, 32
    %v483 = vpop.permute.xlu0 %482
    %v485 = vmul.f32 %v467, %v483
    %v486 = vxor.u32 %v446, 2147483648
    %v487 = vmul.f32 %v486, 1.442695
    %v488 = vpow.pop %v487
    %v489 = vadd.f32 %v488, 1.0
    %v490 = vrcp.pop %v489
    %v491 = vmul.f32 %v489, %v490
    %v492 = vsub.f32 1.0, %v491
    %v493 = vmul.f32 %v490, %v492
    %v494 = vadd.f32 %v490, %v493
    %vm495 = vweird.f32 %v489
    %vm496 = vweird.f32 %v490
    %vm497 = vmor %vm495, %vm496
    %v498 = vsel %vm497, %v490, %v494
    %v499 = vand.u32 2147483647, %v489
    %vm500 = vcmp.eq.f32.partialorder %v499, 8.507059e+37
    %v501 = vand.u32 %v489, 2147483648
    %v502 = vor.u32 1.1754944e-38, %v501
    %v503 = vsel %vm500, %v502, %v498
    %v504 = vmul.f32 1.0, %v503
    %v505 = vtanh.pop %v446
    %v506 = vmul.f32 %v504, %v388
    %508 = vrot.lane.b32.xlu0 %v505, 80
    %v509 = vpop.permute.xlu0 %508
    %v511 = vmul.f32 %v504, %v509
    %513 = vrot.lane.b32.xlu0 %v511, 16
    %v514 = vpop.permute.xlu0 %513
    %v516 = vadd.f32 %v506, %v514
    %v517 = vtanh.pop %v516
    %519 = vrot.lane.b32.xlu0 %v517, 16
    %v520 = vpop.permute.xlu0 %519
    %v522 = vmul.f32 %v504, %v520
    %524 = vrot.lane.b32.xlu0 %v522, 96
    %v525 = vpop.permute.xlu0 %524
    %527 = vst.msk [vmem:[#allocation2 - $0x1] sm:$0x8] %vm270, %v525
    %529 = vrot.lane.b32.xlu0 %v485, 64
    %v530 = vpop.permute.xlu0 %529
    %v532 = vsel %vm39, %v530, %v522
    %v534 = vsel %vm147, %v532, 0
    %536 = vmatpush.msra.mxu0 0.0
    %537 = vmatpush.msra.mxu0 0.0
    %538 = vmatpush.msra.mxu0 0.0
    %539 = vmatpush.msra.mxu0 0.0
    %540 = vmatpush.msra.mxu0 0.0
    %541 = vmatpush.msra.mxu0 0.0
    %542 = vmatpush.msra.mxu0 0.0
    %543 = vmatpush.msra.mxu0 0.0
    %544 = vmatpush.msra.mxu0 0.0
    %545 = vmatpush.msra.mxu0 0.0
    %546 = vmatpush.msra.mxu0 %v26
    %547 = vmatpush.msra.mxu0 %v24
    %548 = vmatpush.msra.mxu0 %v22
    %549 = vmatpush.msra.mxu0 %v20
    %550 = vmatpush.msra.mxu0 %v18
    %551 = vmatpush.msra.mxu0 %v16
    %552 = vmatmul.f32.gmra.mxu0 %v534
    %v553 = vpop.f32.mrf.mxu0
    %v554 = vadd.f32 0.0, %v553
    %555 = vdwg.mxu0
    %556 = vmatpush.msra.mxu0 0.0
    %557 = vmatpush.msra.mxu0 0.0
    %558 = vmatpush.msra.mxu0 0.0
    %559 = vmatpush.msra.mxu0 0.0
    %560 = vmatpush.msra.mxu0 0.0
    %561 = vmatpush.msra.mxu0 0.0
    %562 = vmatpush.msra.mxu0 0.0
    %563 = vmatpush.msra.mxu0 0.0
    %564 = vmatpush.msra.mxu0 0.0
    %565 = vmatpush.msra.mxu0 0.0
    %566 = vmatpush.msra.mxu0 %v27
    %567 = vmatpush.msra.mxu0 %v25
    %568 = vmatpush.msra.mxu0 %v23
    %569 = vmatpush.msra.mxu0 %v21
    %570 = vmatpush.msra.mxu0 %v19
    %571 = vmatpush.msra.mxu0 %v17
    %572 = vmatmul.f32.gmra.mxu0 %v534
    %v573 = vpop.f32.mrf.mxu0
    %v574 = vadd.f32 0.0, %v573
    %575 = vdwg.mxu0
    %v576 = vadd.f32 %v554, %v94
    %v577 = vxor.u32 %v576, 2147483648
    %v578 = vmul.f32 %v577, 1.442695
    %v579 = vpow.pop %v578
    %v580 = vadd.f32 %v579, 1.0
    %v581 = vrcp.pop %v580
    %v582 = vmul.f32 %v580, %v581
    %v583 = vsub.f32 1.0, %v582
    %v584 = vmul.f32 %v581, %v583
    %v585 = vadd.f32 %v581, %v584
    %vm586 = vweird.f32 %v580
    %vm587 = vweird.f32 %v581
    %vm588 = vmor %vm586, %vm587
    %v589 = vsel %vm588, %v581, %v585
    %v590 = vand.u32 2147483647, %v580
    %vm591 = vcmp.eq.f32.partialorder %v590, 8.507059e+37
    %v592 = vand.u32 %v580, 2147483648
    %v593 = vor.u32 1.1754944e-38, %v592
    %v594 = vsel %vm591, %v593, %v589
    %v595 = vmul.f32 1.0, %v594
    %v596 = vtanh.pop %v576
    %v597 = vmul.f32 %v595, %v479
    %599 = vrot.lane.b32.xlu0 %v596, 32
    %v600 = vpop.permute.xlu0 %599
    %v602 = vmul.f32 %v595, %v600
    %604 = vrot.lane.b32.xlu0 %v602, 32
    %v605 = vpop.permute.xlu0 %604
    %v607 = vadd.f32 %v597, %v605
    %v608 = vtanh.pop %v607
    %610 = vrot.lane.b32.xlu0 %v608, 32
    %v611 = vpop.permute.xlu0 %610
    %v613 = vmul.f32 %v595, %v611
    %v614 = vxor.u32 %v574, 2147483648
    %v615 = vmul.f32 %v614, 1.442695
    %v616 = vpow.pop %v615
    %v617 = vadd.f32 %v616, 1.0
    %v618 = vrcp.pop %v617
    %v619 = vmul.f32 %v617, %v618
    %v620 = vsub.f32 1.0, %v619
    %v621 = vmul.f32 %v618, %v620
    %v622 = vadd.f32 %v618, %v621
    %vm623 = vweird.f32 %v617
    %vm624 = vweird.f32 %v618
    %vm625 = vmor %vm623, %vm624
    %v626 = vsel %vm625, %v618, %v622
    %v627 = vand.u32 2147483647, %v617
    %vm628 = vcmp.eq.f32.partialorder %v627, 8.507059e+37
    %v629 = vand.u32 %v617, 2147483648
    %v630 = vor.u32 1.1754944e-38, %v629
    %v631 = vsel %vm628, %v630, %v626
    %v632 = vmul.f32 1.0, %v631
    %v633 = vtanh.pop %v574
    %v634 = vmul.f32 %v632, %v516
    %636 = vrot.lane.b32.xlu0 %v633, 80
    %v637 = vpop.permute.xlu0 %636
    %v639 = vmul.f32 %v632, %v637
    %641 = vrot.lane.b32.xlu0 %v639, 16
    %v642 = vpop.permute.xlu0 %641
    %v644 = vadd.f32 %v634, %v642
    %v645 = vtanh.pop %v644
    %647 = vrot.lane.b32.xlu0 %v645, 16
    %v648 = vpop.permute.xlu0 %647
    %v650 = vmul.f32 %v632, %v648
    %652 = vrot.lane.b32.xlu0 %v650, 96
    %v653 = vpop.permute.xlu0 %652
    %655 = vst.msk [vmem:[#allocation2] sm:$0x8] %vm270, %v653
    %657 = vrot.lane.b32.xlu0 %v613, 64
    %v658 = vpop.permute.xlu0 %657
    %v660 = vsel %vm39, %v658, %v650
    %v662 = vsel %vm147, %v660, 0
    %664 = vmatpush.msra.mxu0 0.0
    %665 = vmatpush.msra.mxu0 0.0
    %666 = vmatpush.msra.mxu0 0.0
    %667 = vmatpush.msra.mxu0 0.0
    %668 = vmatpush.msra.mxu0 0.0
    %669 = vmatpush.msra.mxu0 0.0
    %670 = vmatpush.msra.mxu0 0.0
    %671 = vmatpush.msra.mxu0 0.0
    %672 = vmatpush.msra.mxu0 0.0
    %673 = vmatpush.msra.mxu0 0.0
    %674 = vmatpush.msra.mxu0 %v26
    %675 = vmatpush.msra.mxu0 %v24
    %676 = vmatpush.msra.mxu0 %v22
    %677 = vmatpush.msra.mxu0 %v20
    %678 = vmatpush.msra.mxu0 %v18
    %679 = vmatpush.msra.mxu0 %v16
    %680 = vmatmul.f32.gmra.mxu0 %v662
    %v681 = vpop.f32.mrf.mxu0
    %v682 = vadd.f32 0.0, %v681
    %683 = vdwg.mxu0
    %684 = vmatpush.msra.mxu0 0.0
    %685 = vmatpush.msra.mxu0 0.0
    %686 = vmatpush.msra.mxu0 0.0
    %687 = vmatpush.msra.mxu0 0.0
    %688 = vmatpush.msra.mxu0 0.0
    %689 = vmatpush.msra.mxu0 0.0
    %690 = vmatpush.msra.mxu0 0.0
    %691 = vmatpush.msra.mxu0 0.0
    %692 = vmatpush.msra.mxu0 0.0
    %693 = vmatpush.msra.mxu0 0.0
    %694 = vmatpush.msra.mxu0 %v27
    %695 = vmatpush.msra.mxu0 %v25
    %696 = vmatpush.msra.mxu0 %v23
    %697 = vmatpush.msra.mxu0 %v21
    %698 = vmatpush.msra.mxu0 %v19
    %699 = vmatpush.msra.mxu0 %v17
    %700 = vmatmul.f32.gmra.mxu0 %v662
    %v701 = vpop.f32.mrf.mxu0
    %v702 = vadd.f32 0.0, %v701
    %703 = vdwg.mxu0
    %v704 = vadd.f32 %v682, %v97
    %v705 = vxor.u32 %v704, 2147483648
    %v706 = vmul.f32 %v705, 1.442695
    %v707 = vpow.pop %v706
    %v708 = vadd.f32 %v707, 1.0
    %v709 = vrcp.pop %v708
    %v710 = vmul.f32 %v708, %v709
    %v711 = vsub.f32 1.0, %v710
    %v712 = vmul.f32 %v709, %v711
    %v713 = vadd.f32 %v709, %v712
    %vm714 = vweird.f32 %v708
    %vm715 = vweird.f32 %v709
    %vm716 = vmor %vm714, %vm715
    %v717 = vsel %vm716, %v709, %v713
    %v718 = vand.u32 2147483647, %v708
    %vm719 = vcmp.eq.f32.partialorder %v718, 8.507059e+37
    %v720 = vand.u32 %v708, 2147483648
    %v721 = vor.u32 1.1754944e-38, %v720
    %v722 = vsel %vm719, %v721, %v717
    %v723 = vmul.f32 1.0, %v722
    %v724 = vtanh.pop %v704
    %v725 = vmul.f32 %v723, %v607
    %727 = vrot.lane.b32.xlu0 %v724, 32
    %v728 = vpop.permute.xlu0 %727
    %v730 = vmul.f32 %v723, %v728
    %732 = vrot.lane.b32.xlu0 %v730, 32
    %v733 = vpop.permute.xlu0 %732
    %v735 = vadd.f32 %v725, %v733
    %v736 = vtanh.pop %v735
    %738 = vrot.lane.b32.xlu0 %v736, 32
    %v739 = vpop.permute.xlu0 %738
    %v741 = vmul.f32 %v723, %v739
    %v742 = vxor.u32 %v702, 2147483648
    %v743 = vmul.f32 %v742, 1.442695
    %v744 = vpow.pop %v743
    %v745 = vadd.f32 %v744, 1.0
    %v746 = vrcp.pop %v745
    %v747 = vmul.f32 %v745, %v746
    %v748 = vsub.f32 1.0, %v747
    %v749 = vmul.f32 %v746, %v748
    %v750 = vadd.f32 %v746, %v749
    %vm751 = vweird.f32 %v745
    %vm752 = vweird.f32 %v746
    %vm753 = vmor %vm751, %vm752
    %v754 = vsel %vm753, %v746, %v750
    %v755 = vand.u32 2147483647, %v745
    %vm756 = vcmp.eq.f32.partialorder %v755, 8.507059e+37
    %v757 = vand.u32 %v745, 2147483648
    %v758 = vor.u32 1.1754944e-38, %v757
    %v759 = vsel %vm756, %v758, %v754
    %v760 = vmul.f32 1.0, %v759
    %v761 = vtanh.pop %v702
    %v762 = vmul.f32 %v760, %v644
    %764 = vrot.lane.b32.xlu0 %v761, 80
    %v765 = vpop.permute.xlu0 %764
    %v767 = vmul.f32 %v760, %v765
    %769 = vrot.lane.b32.xlu0 %v767, 16
    %v770 = vpop.permute.xlu0 %769
    %v772 = vadd.f32 %v762, %v770
    %v773 = vtanh.pop %v772
    %775 = vrot.lane.b32.xlu0 %v773, 16
    %v776 = vpop.permute.xlu0 %775
    %v778 = vmul.f32 %v760, %v776
    %780 = vrot.lane.b32.xlu0 %v778, 96
    %v781 = vpop.permute.xlu0 %780
    %783 = vst.msk [vmem:[#allocation2 + $0x1] sm:$0x8] %vm270, %v781
    %785 = vrot.lane.b32.xlu0 %v741, 64
    %v786 = vpop.permute.xlu0 %785
    %v788 = vsel %vm39, %v786, %v778
    %v790 = vsel %vm147, %v788, 0
    %792 = vmatpush.msra.mxu0 0.0
    %793 = vmatpush.msra.mxu0 0.0
    %794 = vmatpush.msra.mxu0 0.0
    %795 = vmatpush.msra.mxu0 0.0
    %796 = vmatpush.msra.mxu0 0.0
    %797 = vmatpush.msra.mxu0 0.0
    %798 = vmatpush.msra.mxu0 0.0
    %799 = vmatpush.msra.mxu0 0.0
    %800 = vmatpush.msra.mxu0 0.0
    %801 = vmatpush.msra.mxu0 0.0
    %802 = vmatpush.msra.mxu0 %v26
    %803 = vmatpush.msra.mxu0 %v24
    %804 = vmatpush.msra.mxu0 %v22
    %805 = vmatpush.msra.mxu0 %v20
    %806 = vmatpush.msra.mxu0 %v18
    %807 = vmatpush.msra.mxu0 %v16
    %808 = vmatmul.f32.gmra.mxu0 %v790
    %v809 = vpop.f32.mrf.mxu0
    %v810 = vadd.f32 0.0, %v809
    %811 = vdwg.mxu0
    %812 = vmatpush.msra.mxu0 0.0
    %813 = vmatpush.msra.mxu0 0.0
    %814 = vmatpush.msra.mxu0 0.0
    %815 = vmatpush.msra.mxu0 0.0
    %816 = vmatpush.msra.mxu0 0.0
    %817 = vmatpush.msra.mxu0 0.0
    %818 = vmatpush.msra.mxu0 0.0
    %819 = vmatpush.msra.mxu0 0.0
    %820 = vmatpush.msra.mxu0 0.0
    %821 = vmatpush.msra.mxu0 0.0
    %822 = vmatpush.msra.mxu0 %v27
    %823 = vmatpush.msra.mxu0 %v25
    %824 = vmatpush.msra.mxu0 %v23
    %825 = vmatpush.msra.mxu0 %v21
    %826 = vmatpush.msra.mxu0 %v19
    %827 = vmatpush.msra.mxu0 %v17
    %828 = vmatmul.f32.gmra.mxu0 %v790
    %v829 = vpop.f32.mrf.mxu0
    %v830 = vadd.f32 0.0, %v829
    %831 = vdwg.mxu0
    %v832 = vadd.f32 %v810, %v100
    %v833 = vxor.u32 %v832, 2147483648
    %v834 = vmul.f32 %v833, 1.442695
    %v835 = vpow.pop %v834
    %v836 = vadd.f32 %v835, 1.0
    %v837 = vrcp.pop %v836
    %v838 = vmul.f32 %v836, %v837
    %v839 = vsub.f32 1.0, %v838
    %v840 = vmul.f32 %v837, %v839
    %v841 = vadd.f32 %v837, %v840
    %vm842 = vweird.f32 %v836
    %vm843 = vweird.f32 %v837
    %vm844 = vmor %vm842, %vm843
    %v845 = vsel %vm844, %v837, %v841
    %v846 = vand.u32 2147483647, %v836
    %vm847 = vcmp.eq.f32.partialorder %v846, 8.507059e+37
    %v848 = vand.u32 %v836, 2147483648
    %v849 = vor.u32 1.1754944e-38, %v848
    %v850 = vsel %vm847, %v849, %v845
    %v851 = vmul.f32 1.0, %v850
    %v852 = vtanh.pop %v832
    %v853 = vmul.f32 %v851, %v735
    %855 = vrot.lane.b32.xlu0 %v852, 32
    %v856 = vpop.permute.xlu0 %855
    %v858 = vmul.f32 %v851, %v856
    %860 = vrot.lane.b32.xlu0 %v858, 32
    %v861 = vpop.permute.xlu0 %860
    %v863 = vadd.f32 %v853, %v861
    %v864 = vtanh.pop %v863
    %866 = vrot.lane.b32.xlu0 %v864, 32
    %v867 = vpop.permute.xlu0 %866
    %v869 = vmul.f32 %v851, %v867
    %v870 = vxor.u32 %v830, 2147483648
    %v871 = vmul.f32 %v870, 1.442695
    %v872 = vpow.pop %v871
    %v873 = vadd.f32 %v872, 1.0
    %v874 = vrcp.pop %v873
    %v875 = vmul.f32 %v873, %v874
    %v876 = vsub.f32 1.0, %v875
    %v877 = vmul.f32 %v874, %v876
    %v878 = vadd.f32 %v874, %v877
    %vm879 = vweird.f32 %v873
    %vm880 = vweird.f32 %v874
    %vm881 = vmor %vm879, %vm880
    %v882 = vsel %vm881, %v874, %v878
    %v883 = vand.u32 2147483647, %v873
    %vm884 = vcmp.eq.f32.partialorder %v883, 8.507059e+37
    %v885 = vand.u32 %v873, 2147483648
    %v886 = vor.u32 1.1754944e-38, %v885
    %v887 = vsel %vm884, %v886, %v882
    %v888 = vmul.f32 1.0, %v887
    %v889 = vtanh.pop %v830
    %v890 = vmul.f32 %v888, %v772
    %892 = vrot.lane.b32.xlu0 %v889, 80
    %v893 = vpop.permute.xlu0 %892
    %v895 = vmul.f32 %v888, %v893
    %897 = vrot.lane.b32.xlu0 %v895, 16
    %v898 = vpop.permute.xlu0 %897
    %v900 = vadd.f32 %v890, %v898
    %v901 = vtanh.pop %v900
    %903 = vrot.lane.b32.xlu0 %v901, 16
    %v904 = vpop.permute.xlu0 %903
    %v906 = vmul.f32 %v888, %v904
    %908 = vrot.lane.b32.xlu0 %v906, 96
    %v909 = vpop.permute.xlu0 %908
    %911 = vst.msk [vmem:[#allocation2 + $0x2] sm:$0x8] %vm270, %v909
    %913 = vrot.lane.b32.xlu0 %v869, 64
    %v914 = vpop.permute.xlu0 %913
    %v916 = vsel %vm39, %v914, %v906
    %v918 = vsel %vm147, %v916, 0
    %920 = vmatpush.msra.mxu0 0.0
    %921 = vmatpush.msra.mxu0 0.0
    %922 = vmatpush.msra.mxu0 0.0
    %923 = vmatpush.msra.mxu0 0.0
    %924 = vmatpush.msra.mxu0 0.0
    %925 = vmatpush.msra.mxu0 0.0
    %926 = vmatpush.msra.mxu0 0.0
    %927 = vmatpush.msra.mxu0 0.0
    %928 = vmatpush.msra.mxu0 0.0
    %929 = vmatpush.msra.mxu0 0.0
    %930 = vmatpush.msra.mxu0 %v26
    %931 = vmatpush.msra.mxu0 %v24
    %932 = vmatpush.msra.mxu0 %v22
    %933 = vmatpush.msra.mxu0 %v20
    %934 = vmatpush.msra.mxu0 %v18
    %935 = vmatpush.msra.mxu0 %v16
    %936 = vmatmul.f32.gmra.mxu0 %v918
    %v937 = vpop.f32.mrf.mxu0
    %v938 = vadd.f32 0.0, %v937
    %939 = vdwg.mxu0
    %940 = vmatpush.msra.mxu0 0.0
    %941 = vmatpush.msra.mxu0 0.0
    %942 = vmatpush.msra.mxu0 0.0
    %943 = vmatpush.msra.mxu0 0.0
    %944 = vmatpush.msra.mxu0 0.0
    %945 = vmatpush.msra.mxu0 0.0
    %946 = vmatpush.msra.mxu0 0.0
    %947 = vmatpush.msra.mxu0 0.0
    %948 = vmatpush.msra.mxu0 0.0
    %949 = vmatpush.msra.mxu0 0.0
    %950 = vmatpush.msra.mxu0 %v27
    %951 = vmatpush.msra.mxu0 %v25
    %952 = vmatpush.msra.mxu0 %v23
    %953 = vmatpush.msra.mxu0 %v21
    %954 = vmatpush.msra.mxu0 %v19
    %955 = vmatpush.msra.mxu0 %v17
    %956 = vmatmul.f32.gmra.mxu0 %v918
    %v957 = vpop.f32.mrf.mxu0
    %v958 = vadd.f32 0.0, %v957
    %959 = vdwg.mxu0
    %v960 = vadd.f32 %v938, %v103
    %v961 = vxor.u32 %v960, 2147483648
    %v962 = vmul.f32 %v961, 1.442695
    %v963 = vpow.pop %v962
    %v964 = vadd.f32 %v963, 1.0
    %v965 = vrcp.pop %v964
    %v966 = vmul.f32 %v964, %v965
    %v967 = vsub.f32 1.0, %v966
    %v968 = vmul.f32 %v965, %v967
    %v969 = vadd.f32 %v965, %v968
    %vm970 = vweird.f32 %v964
    %vm971 = vweird.f32 %v965
    %vm972 = vmor %vm970, %vm971
    %v973 = vsel %vm972, %v965, %v969
    %v974 = vand.u32 2147483647, %v964
    %vm975 = vcmp.eq.f32.partialorder %v974, 8.507059e+37
    %v976 = vand.u32 %v964, 2147483648
    %v977 = vor.u32 1.1754944e-38, %v976
    %v978 = vsel %vm975, %v977, %v973
    %v979 = vmul.f32 1.0, %v978
    %v980 = vtanh.pop %v960
    %v981 = vmul.f32 %v979, %v863
    %983 = vrot.lane.b32.xlu0 %v980, 32
    %v984 = vpop.permute.xlu0 %983
    %v986 = vmul.f32 %v979, %v984
    %988 = vrot.lane.b32.xlu0 %v986, 32
    %v989 = vpop.permute.xlu0 %988
    %v991 = vadd.f32 %v981, %v989
    %v992 = vtanh.pop %v991
    %994 = vrot.lane.b32.xlu0 %v992, 32
    %v995 = vpop.permute.xlu0 %994
    %v997 = vmul.f32 %v979, %v995
    %v998 = vxor.u32 %v958, 2147483648
    %v999 = vmul.f32 %v998, 1.442695
    %v1000 = vpow.pop %v999
    %v1001 = vadd.f32 %v1000, 1.0
    %v1002 = vrcp.pop %v1001
    %v1003 = vmul.f32 %v1001, %v1002
    %v1004 = vsub.f32 1.0, %v1003
    %v1005 = vmul.f32 %v1002, %v1004
    %v1006 = vadd.f32 %v1002, %v1005
    %vm1007 = vweird.f32 %v1001
    %vm1008 = vweird.f32 %v1002
    %vm1009 = vmor %vm1007, %vm1008
    %v1010 = vsel %vm1009, %v1002, %v1006
    %v1011 = vand.u32 2147483647, %v1001
    %vm1012 = vcmp.eq.f32.partialorder %v1011, 8.507059e+37
    %v1013 = vand.u32 %v1001, 2147483648
    %v1014 = vor.u32 1.1754944e-38, %v1013
    %v1015 = vsel %vm1012, %v1014, %v1010
    %v1016 = vmul.f32 1.0, %v1015
    %v1017 = vtanh.pop %v958
    %v1018 = vmul.f32 %v1016, %v900
    %1020 = vrot.lane.b32.xlu0 %v1017, 80
    %v1021 = vpop.permute.xlu0 %1020
    %v1023 = vmul.f32 %v1016, %v1021
    %1025 = vrot.lane.b32.xlu0 %v1023, 16
    %v1026 = vpop.permute.xlu0 %1025
    %v1028 = vadd.f32 %v1018, %v1026
    %v1029 = vtanh.pop %v1028
    %1031 = vrot.lane.b32.xlu0 %v1029, 16
    %v1032 = vpop.permute.xlu0 %1031
    %v1034 = vmul.f32 %v1016, %v1032
    %1036 = vrot.lane.b32.xlu0 %v1034, 96
    %v1037 = vpop.permute.xlu0 %1036
    %1039 = vst.msk [vmem:[#allocation2 + $0x3] sm:$0x8] %vm270, %v1037
    %1041 = vrot.lane.b32.xlu0 %v997, 64
    %v1042 = vpop.permute.xlu0 %1041
    %v1044 = vsel %vm39, %v1042, %v1034
    %v1046 = vsel %vm147, %v1044, 0
    %1048 = vmatpush.msra.mxu0 0.0
    %1049 = vmatpush.msra.mxu0 0.0
    %1050 = vmatpush.msra.mxu0 0.0
    %1051 = vmatpush.msra.mxu0 0.0
    %1052 = vmatpush.msra.mxu0 0.0
    %1053 = vmatpush.msra.mxu0 0.0
    %1054 = vmatpush.msra.mxu0 0.0
    %1055 = vmatpush.msra.mxu0 0.0
    %1056 = vmatpush.msra.mxu0 0.0
    %1057 = vmatpush.msra.mxu0 0.0
    %1058 = vmatpush.msra.mxu0 %v27
    %1059 = vmatpush.msra.mxu0 %v25
    %1060 = vmatpush.msra.mxu0 %v23
    %1061 = vmatpush.msra.mxu0 %v21
    %1062 = vmatpush.msra.mxu0 %v19
    %1063 = vmatpush.msra.mxu0 %v17
    %1064 = vmatmul.f32.gmra.mxu0 %v1046
    %v1065 = vpop.f32.mrf.mxu0
    %v1066 = vadd.f32 0.0, %v1065
    %1067 = vdwg.mxu0
    %v1068 = vxor.u32 %v1066, 2147483648
    %v1069 = vmul.f32 %v1068, 1.442695
    %v1070 = vpow.pop %v1069
    %v1071 = vadd.f32 %v1070, 1.0
    %v1072 = vrcp.pop %v1071
    %v1073 = vmul.f32 %v1071, %v1072
    %v1074 = vsub.f32 1.0, %v1073
    %v1075 = vmul.f32 %v1072, %v1074
    %v1076 = vadd.f32 %v1072, %v1075
    %vm1077 = vweird.f32 %v1071
    %vm1078 = vweird.f32 %v1072
    %vm1079 = vmor %vm1077, %vm1078
    %v1080 = vsel %vm1079, %v1072, %v1076
    %v1081 = vand.u32 2147483647, %v1071
    %vm1082 = vcmp.eq.f32.partialorder %v1081, 8.507059e+37
    %v1083 = vand.u32 %v1071, 2147483648
    %v1084 = vor.u32 1.1754944e-38, %v1083
    %v1085 = vsel %vm1082, %v1084, %v1080
    %v1086 = vmul.f32 1.0, %v1085
    %v1087 = vtanh.pop %v1066
    %v1088 = vmul.f32 %v1086, %v1028
    %1090 = vrot.lane.b32.xlu0 %v1087, 80
    %v1091 = vpop.permute.xlu0 %1090
    %v1093 = vmul.f32 %v1086, %v1091
    %1095 = vrot.lane.b32.xlu0 %v1093, 16
    %v1096 = vpop.permute.xlu0 %1095
    %v1098 = vadd.f32 %v1088, %v1096
    %v1099 = vtanh.pop %v1098
    %1101 = vrot.lane.b32.xlu0 %v1099, 16
    %v1102 = vpop.permute.xlu0 %1101
    %v1104 = vmul.f32 %v1086, %v1102
    %1106 = vrot.lane.b32.xlu0 %v1104, 96
    %v1107 = vpop.permute.xlu0 %1106
    %1109 = vst.msk [vmem:[#allocation2 + $0x4] sm:$0x8] %vm270, %v1107
    %v1110 = vld [vmem:[#allocation2] sm:$0xff]
    %vm1111 = vcmask 130048
    %v1113 = vsel %vm1111, %v1110, 0
    %1115 = vmatpush.msra.mxu0 0.0
    %1116 = vmatpush.msra.mxu0 0.0
    %1117 = vmatpush.msra.mxu0 0.0
    %1118 = vmatpush.msra.mxu0 0.0
    %1119 = vmatpush.msra.mxu0 0.0
    %1120 = vmatpush.msra.mxu0 0.0
    %1121 = vmatpush.msra.mxu0 0.0
    %1122 = vmatpush.msra.mxu0 0.0
    %1123 = vmatpush.msra.mxu0 0.0
    %1124 = vmatpush.msra.mxu0 0.0
    %1125 = vmatpush.msra.mxu0 0.0
    %1126 = vmatpush.msra.mxu0 0.0
    %1127 = vmatpush.msra.mxu0 0.0
    %1128 = vmatpush.msra.mxu0 0.0
    %1129 = vmatpush.msra.mxu0 %v29
    %1130 = vmatpush.msra.mxu0 %v28
    %1131 = vmatmul.f32.gmra.mxu0 %v1113
    %v1132 = vpop.f32.mrf.mxu0
    %v1133 = vadd.f32 %v30, %v1132
    %1134 = vdwg.mxu0
    %1135 = vst [vmem:[#allocation3] sm:$0xff] %v1133
    // Predicated region
    $region10: #{tpu_custom_call.1} parent=1 // pred_check
      _
    $region11: #{tpu_custom_call.1} parent=1 // pred_check_branch
      %1137 = sbr.rel (0) target = $region13
    $region12: #{tpu_custom_call.1} parent=1 // pred_region
      %1139 = vsyncadd [#allocation4], 0
      %s1141 = sshll.u32 [#allocation3], 4
      %s1142 = int_to_ptr.vmem [resolvable:$true] %s1141
      %s1143 = sshll.u32 %s2, 4
      %s1144 = int_to_ptr.hbm [resolvable:$true] %s1143
      %1146 = dma.vmem_to_hbm [thread:$0]  %s1142, 128, %s1144, [#allocation4]
    $region13: #{tpu_custom_call.1} parent=1 // pred_fallthru
      _
    // Predicated region
    $region14: #{tpu_custom_call.1} parent=1 // pred_check
      _
    $region15: #{tpu_custom_call.1} parent=1 // pred_check_branch
      %1148 = sbr.rel (0) target = $region17
    $region16: #{tpu_custom_call.1} parent=1 // pred_region
      %1150 = dma.done [#allocation4], 128
    $region17: #{tpu_custom_call.1} parent=1 // pred_fallthru
      _
    %1151 = vsyncpa [#allocation4], 1

</llo_original>
